<compile_context>
chip_gen: v7x
topology: tpu7x:2x2x1
jax: 0.10.0
libtpu: 0.0.40
codegen_flags: <defaults>
</compile_context>

<pallas_src>
import functools
import math

import jax
import jax.numpy as jnp
from jax import lax
from jax.experimental import pallas as pl
from jax.experimental.pallas import tpu as pltpu


def _round_up(x, m):
    return ((x + m - 1) // m) * m


def _sublane(dtype):
    return {4: 8, 2: 16, 1: 32}[jnp.dtype(dtype).itemsize]


def _conv_kernel(x_ref, *rest, kh, kw, stride, th_out, w_work, c_in, c_out,
                 apply_relu, has_halo):
    """One (batch, row-tile) step of the reflection-padded conv.

    x_ref : (1, th_out*stride, Wp_work, C_in)  main row window of the padded image
    xh_ref: (1, kh-1, Wp_work, C_in)           halo rows (present only if kh > 1)
    w_ref : (kh*kw*C_in, C_out_pad)            im2col-ordered weights
    b_ref : (1, C_out_pad)                     bias (f32)
    o_ref : (1, C_out, th_out*w_work)          lane-dense NCHW output tile
    """
    if has_halo:
        xh_ref, w_ref, b_ref, o_ref = rest
    else:
        w_ref, b_ref, o_ref = rest

    th_in = th_out * stride
    xw = x_ref[0]                                           # (th_in, Wp_work, C_in)
    if has_halo:
        # leading-dim concat (layout trivial): (th_in + kh - 1, Wp_work, C_in)
        xw = jnp.concatenate([xw, xh_ref[0]], axis=0)

    m_tile = th_out * w_work
    taps = []
    for i in range(kh):                                     # static tap loops
        rows = xw[i:i + th_in]                              # (th_in, Wp_work, C_in)
        if stride > 1:
            # keep every stride-th input row (row stride folded into the kernel):
            # leading-dim split + index, no relayout.
            rows = rows.reshape(th_out, stride, rows.shape[1], c_in)[:, 0]
        for j in range(kw):
            win = rows[:, j:j + w_work, :]                  # (th_out, w_work, C_in)
            # trivial collapse: w_work is a multiple of the sublane tile
            taps.append(win.reshape(m_tile, c_in))
    # Dense on-chip im2col: all kh*kw taps packed into the MXU contraction dim.
    lhs = taps[0] if len(taps) == 1 else jnp.concatenate(taps, axis=-1)  # (m_tile, K2)

    # Single MXU dot, single f32 accumulator write.
    acc = jnp.dot(lhs, w_ref[...], preferred_element_type=jnp.float32)   # (m_tile, C_out_pad)
    acc = acc + b_ref[...].astype(jnp.float32)
    if apply_relu:
        acc = jnp.maximum(acc, 0.0)

    # Lane-dense NCHW store: transpose on the (otherwise idle) XLU and drop the
    # C_out lane padding before it ever reaches HBM.
    acc_t = acc.T                                           # (C_out_pad, m_tile)
    o_ref[0] = acc_t[:c_out, :].astype(o_ref.dtype)


def conv_layer_forward(x, weight, bias, *, stride=1, is_last=False,
                       compute_dtype=jnp.bfloat16, target_rows=1024):
    """Forward pass of ConvLayer (reflection pad -> conv -> optional ReLU).

    x:      (N, C_in, H, W)  NCHW, like PyTorch
    weight: (C_out, C_in, KH, KW)
    bias:   (C_out,)
    """
    N, C_in, H, W = x.shape
    C_out, C_in_w, KH, KW = weight.shape
    assert C_in_w == C_in
    pad = KH // 2                       # int(floor(kernel_size / 2)); square kernels
    assert pad < H and pad < W, "ReflectionPad2d requires spatial dims > padding"

    out_dtype = x.dtype
    has_halo = KH > 1

    # ---- wrapper glue: NCHW -> NHWC, cast fused into the reflection pad --------
    # TODO(synk): keep activations NHWC between ConvLayers so this transpose only
    # happens at network boundaries.
    x_nhwc = jnp.transpose(x, (0, 2, 3, 1)).astype(compute_dtype)
    if pad > 0:
        xp = jnp.pad(x_nhwc, ((0, 0), (pad, pad), (pad, pad), (0, 0)), mode="reflect")
    else:
        xp = x_nhwc
    Hp, Wp = H + 2 * pad, W + 2 * pad
    assert Hp >= KH and Wp >= KW

    H_out = (Hp - KH) // stride + 1     # PyTorch Conv2d output height (stride folded)
    W_conv = Wp - KW + 1                # stride-1 column count computed in-kernel
    W_out = (Wp - KW) // stride + 1

    # ---- tiling ------------------------------------------------------------------
    sub_c = _sublane(compute_dtype)
    # pad W so the in-kernel (th_out, W_work, C_in) -> (m_tile, C_in) collapse is
    # layout-trivial for the compute dtype (8 for f32, 16 for bf16)
    W_work = _round_up(W_conv, sub_c)
    Wp_work = W_work + KW - 1

    unit = 128 // math.gcd(W_work, 128)            # => m_tile % 128 == 0 (lane-dense out)
    if has_halo:
        d = KH - 1
        need = d // math.gcd(stride, d)            # => th_in % (KH-1) == 0 (halo block idx)
        unit = unit * need // math.gcd(unit, need)
    th_out = min(max(unit, (target_rows // W_work) // unit * unit),
                 _round_up(H_out, unit))
    th_in = th_out * stride
    m_tile = th_out * W_work
    HT = -(-H_out // th_out)
    H_out_pad = HT * th_out

    # bottom zero-pad: every main/halo row block fully in bounds and exactly divisible
    Hp_pad = (HT + 1) * th_in if has_halo else HT * th_in
    xp = jnp.pad(xp, ((0, 0), (0, Hp_pad - Hp), (0, Wp_work - Wp), (0, 0)))
    # TODO(synk): for tiny C_in a lane-dense (N, Hp, Wp*C_in) input layout would
    # avoid the 4/128-lane VMEM waste of channels-last blocks.

    # ---- operands: im2col weights (K2, C_out_pad) and f32 bias row ---------------
    K2 = KH * KW * C_in
    C_out_pad = _round_up(C_out, 128)              # MXU lanes only, never written to HBM
    w2 = jnp.transpose(weight, (2, 3, 1, 0)).reshape(K2, C_out)   # (i, j, c) order
    w2 = jnp.pad(w2, ((0, 0), (0, C_out_pad - C_out))).astype(compute_dtype)
    b2 = jnp.pad(bias.astype(jnp.float32), (0, C_out_pad - C_out)).reshape(1, C_out_pad)

    # ---- specs --------------------------------------------------------------------
    in_specs = [pl.BlockSpec((1, th_in, Wp_work, C_in), lambda n, t: (n, t, 0, 0))]
    operands = [xp]
    if has_halo:
        halo = KH - 1
        hb = th_in // halo
        in_specs.append(pl.BlockSpec((1, halo, Wp_work, C_in),
                                     lambda n, t: (n, (t + 1) * hb, 0, 0)))
        operands.append(xp)
    # TODO(synk): on v5e add pipeline_mode=pl.Buffered(3) to the row-window specs to
    # hide the lower HBM bandwidth for large images.
    in_specs += [pl.BlockSpec((K2, C_out_pad), lambda n, t: (0, 0)),
                 pl.BlockSpec((1, C_out_pad), lambda n, t: (0, 0))]
    operands += [w2, b2]

    # ---- VMEM budget from padded (sublane, 128)-tile layouts -----------------------
    def blk_bytes(shape, dtype):
        it = jnp.dtype(dtype).itemsize
        sub = _sublane(dtype)
        lead = 1
        for dd in shape[:-2]:
            lead *= int(dd)
        s = int(shape[-2]) if len(shape) >= 2 else 1
        l = int(shape[-1])
        return lead * _round_up(s, sub) * _round_up(l, 128) * it

    io_bytes = 2 * (blk_bytes((1, th_in, Wp_work, C_in), compute_dtype)
                    + (blk_bytes((1, KH - 1, Wp_work, C_in), compute_dtype) if has_halo else 0)
                    + blk_bytes((K2, C_out_pad), compute_dtype)
                    + blk_bytes((1, C_out_pad), jnp.float32)
                    + blk_bytes((1, C_out, m_tile), out_dtype))
    tmp_bytes = (blk_bytes((th_in + KH - 1, Wp_work, C_in), compute_dtype)     # row window
                 + KH * KW * blk_bytes((m_tile, C_in), compute_dtype)          # tap windows
                 + blk_bytes((m_tile, K2), compute_dtype)                      # im2col LHS
                 + 2 * blk_bytes((m_tile, C_out_pad), jnp.float32))            # acc + acc.T
    vmem_limit = int(min(max(io_bytes + 2 * tmp_bytes + (4 << 20), 16 << 20), 48 << 20))

    kernel = functools.partial(
        _conv_kernel, kh=KH, kw=KW, stride=stride, th_out=th_out, w_work=W_work,
        c_in=C_in, c_out=C_out, apply_relu=not is_last, has_halo=has_halo)

    flops = 2 * N * H_out * W_out * C_out * KH * KW * C_in
    bytes_accessed = (int(xp.size) * jnp.dtype(compute_dtype).itemsize
                      + int(w2.size) * jnp.dtype(compute_dtype).itemsize
                      + N * C_out * H_out_pad * W_work * jnp.dtype(out_dtype).itemsize)

    out3 = pl.pallas_call(
        kernel,
        out_shape=jax.ShapeDtypeStruct((N, C_out, HT * m_tile), out_dtype),
        grid=(N, HT),
        in_specs=in_specs,
        out_specs=pl.BlockSpec((1, C_out, m_tile), lambda n, t: (n, 0, t)),
        compiler_params=pltpu.CompilerParams(
            dimension_semantics=("parallel", "parallel"),
            vmem_limit_bytes=vmem_limit),
        cost_estimate=pl.CostEstimate(flops=int(flops), transcendentals=0,
                                      bytes_accessed=int(bytes_accessed)),
    )(*operands)

    # kernel already produced NCHW: only reshape + slice off the alignment padding
    out = out3.reshape(N, C_out, H_out_pad, W_work)[:, :, :H_out, :W_conv]
    if stride > 1:
        # TODO(synk): fold the column stride into the kernel store as well (the row
        # stride already is); this wrapper subsample costs ~stride x extra columns.
        out = out[:, :, :, ::stride]
    return out


def _reference_forward(x, weight, bias, *, stride, is_last):
    """Pure-JAX reference (reflection pad + conv + relu) for verification."""
    pad = weight.shape[2] // 2
    x_nhwc = jnp.transpose(x, (0, 2, 3, 1))
    if pad > 0:
        xp = jnp.pad(x_nhwc, ((0, 0), (pad, pad), (pad, pad), (0, 0)), mode="reflect")
    else:
        xp = x_nhwc
    w_hwio = jnp.transpose(weight, (2, 3, 1, 0))
    out = lax.conv_general_dilated(
        xp, w_hwio, window_strides=(stride, stride), padding="VALID",
        dimension_numbers=("NHWC", "HWIO", "NHWC"))
    out = out + bias.reshape(1, 1, 1, -1)
    if not is_last:
        out = jnp.maximum(out, 0.0)
    return jnp.transpose(out, (0, 3, 1, 2))


if __name__ == "__main__":
    # Small shapes consistent with the module: batch=2, in_ch=4, out_ch=8,
    # spatial 16x16, kernel_size=3, stride=1, is_last=False.
    N, C_in, C_out, H, W = 2, 4, 8, 16, 16
    kernel_size, stride, is_last = 3, 1, False

    key = jax.random.PRNGKey(0)
    kx, kw_, kb = jax.random.split(key, 3)

    x = jax.random.normal(kx, (N, C_in, H, W), dtype=jnp.float32)
    fan_in = C_in * kernel_size * kernel_size
    bound = 1.0 / math.sqrt(fan_in)
    weight = jax.random.uniform(
        kw_, (C_out, C_in, kernel_size, kernel_size),
        minval=-bound, maxval=bound, dtype=jnp.float32)
    bias = jax.random.uniform(kb, (C_out,), minval=-bound, maxval=bound,
                              dtype=jnp.float32)

    ref = _reference_forward(x, weight, bias, stride=stride, is_last=is_last)

    # Exact f32 path.
    out_f32 = jax.block_until_ready(
        conv_layer_forward(x, weight, bias, stride=stride, is_last=is_last,
                           compute_dtype=jnp.float32))
    assert out_f32.shape == ref.shape == (N, C_out, H, W)
    assert jnp.allclose(out_f32, ref, atol=1e-4, rtol=1e-4)

    # Default bf16 MXU path (f32 accumulate): looser tolerance.
    out_bf16 = jax.block_until_ready(
        conv_layer_forward(x, weight, bias, stride=stride, is_last=is_last))
    assert jnp.allclose(out_bf16, ref, atol=3e-2, rtol=3e-2)

    # is_last=True (no ReLU) branch.
    ref_last = _reference_forward(x, weight, bias, stride=stride, is_last=True)
    out_last = jax.block_until_ready(
        conv_layer_forward(x, weight, bias, stride=stride, is_last=True,
                           compute_dtype=jnp.float32))
    assert jnp.allclose(out_last, ref_last, atol=1e-4, rtol=1e-4)

    # stride=2 branch (row stride folded in-kernel, column stride in wrapper).
    ref_s2 = _reference_forward(x, weight, bias, stride=2, is_last=is_last)
    out_s2 = jax.block_until_ready(
        conv_layer_forward(x, weight, bias, stride=2, is_last=is_last,
                           compute_dtype=jnp.float32))
    assert out_s2.shape == ref_s2.shape
    assert jnp.allclose(out_s2, ref_s2, atol=1e-4, rtol=1e-4)

    print("KERNEL_OK")
</pallas_src>

<mosaic_0001>
module attributes {stable_mosaic.version = 11 : i64} {
  func.func @_conv_kernel(%arg0: i32, %arg1: i32, %arg2: memref<1x16x18x4xf32, #tpu.memory_space<vmem>>, %arg3: memref<1x2x18x4xf32, #tpu.memory_space<vmem>>, %arg4: memref<36x128xf32, #tpu.memory_space<vmem>>, %arg5: memref<1x128xf32, #tpu.memory_space<vmem>>, %arg6: memref<1x8x256xf32, #tpu.memory_space<vmem>>) attributes {dimension_semantics = [#tpu.dimension_semantics<parallel>, #tpu.dimension_semantics<parallel>], iteration_bounds = array<i64: 2, 1>, scalar_prefetch = 0 : i64, scratch_operands = 0 : i64, tpu.core_type = #tpu.core_type<tc>, window_params = [{transform_indices = @transform_0, window_bounds = array<i64: 1, 16, 18, 4>}, {transform_indices = @transform_1, window_bounds = array<i64: 1, 2, 18, 4>}, {pipeline_mode = #tpu.pipeline_mode<synchronous>, transform_indices = @transform_2, window_bounds = array<i64: 36, 128>}, {pipeline_mode = #tpu.pipeline_mode<synchronous>, transform_indices = @transform_3, window_bounds = array<i64: 1, 128>}, {transform_indices = @transform_4, window_bounds = array<i64: 1, 8, 256>}]} {
    %c0 = arith.constant 0 : index
    %c0_0 = arith.constant 0 : index
    %c0_1 = arith.constant 0 : index
    %c0_2 = arith.constant 0 : index
    %0 = vector.load %arg2[%c0, %c0_0, %c0_1, %c0_2] : memref<1x16x18x4xf32, #tpu.memory_space<vmem>>, vector<1x16x18x4xf32>
    %1 = vector.shape_cast %0 : vector<1x16x18x4xf32> to vector<16x18x4xf32>
    %c0_3 = arith.constant 0 : index
    %c0_4 = arith.constant 0 : index
    %c0_5 = arith.constant 0 : index
    %c0_6 = arith.constant 0 : index
    %2 = vector.load %arg3[%c0_3, %c0_4, %c0_5, %c0_6] : memref<1x2x18x4xf32, #tpu.memory_space<vmem>>, vector<1x2x18x4xf32>
    %3 = vector.shape_cast %2 : vector<1x2x18x4xf32> to vector<2x18x4xf32>
    %4 = tpu.concatenate %1, %3 in 0 : vector<16x18x4xf32>, vector<2x18x4xf32> -> vector<18x18x4xf32>
    %5 = vector.extract_strided_slice %4 {offsets = [0, 0, 0], sizes = [16, 18, 4], strides = [1, 1, 1]} : vector<18x18x4xf32> to vector<16x18x4xf32>
    %6 = vector.extract_strided_slice %5 {offsets = [0, 0, 0], sizes = [16, 16, 4], strides = [1, 1, 1]} : vector<16x18x4xf32> to vector<16x16x4xf32>
    %7 = vector.shape_cast %6 : vector<16x16x4xf32> to vector<256x4xf32>
    %8 = vector.extract_strided_slice %5 {offsets = [0, 1, 0], sizes = [16, 16, 4], strides = [1, 1, 1]} : vector<16x18x4xf32> to vector<16x16x4xf32>
    %9 = vector.shape_cast %8 : vector<16x16x4xf32> to vector<256x4xf32>
    %10 = vector.extract_strided_slice %5 {offsets = [0, 2, 0], sizes = [16, 16, 4], strides = [1, 1, 1]} : vector<16x18x4xf32> to vector<16x16x4xf32>
    %11 = vector.shape_cast %10 : vector<16x16x4xf32> to vector<256x4xf32>
    %12 = vector.extract_strided_slice %4 {offsets = [1, 0, 0], sizes = [16, 18, 4], strides = [1, 1, 1]} : vector<18x18x4xf32> to vector<16x18x4xf32>
    %13 = vector.extract_strided_slice %12 {offsets = [0, 0, 0], sizes = [16, 16, 4], strides = [1, 1, 1]} : vector<16x18x4xf32> to vector<16x16x4xf32>
    %14 = vector.shape_cast %13 : vector<16x16x4xf32> to vector<256x4xf32>
    %15 = vector.extract_strided_slice %12 {offsets = [0, 1, 0], sizes = [16, 16, 4], strides = [1, 1, 1]} : vector<16x18x4xf32> to vector<16x16x4xf32>
    %16 = vector.shape_cast %15 : vector<16x16x4xf32> to vector<256x4xf32>
    %17 = vector.extract_strided_slice %12 {offsets = [0, 2, 0], sizes = [16, 16, 4], strides = [1, 1, 1]} : vector<16x18x4xf32> to vector<16x16x4xf32>
    %18 = vector.shape_cast %17 : vector<16x16x4xf32> to vector<256x4xf32>
    %19 = vector.extract_strided_slice %4 {offsets = [2, 0, 0], sizes = [16, 18, 4], strides = [1, 1, 1]} : vector<18x18x4xf32> to vector<16x18x4xf32>
    %20 = vector.extract_strided_slice %19 {offsets = [0, 0, 0], sizes = [16, 16, 4], strides = [1, 1, 1]} : vector<16x18x4xf32> to vector<16x16x4xf32>
    %21 = vector.shape_cast %20 : vector<16x16x4xf32> to vector<256x4xf32>
    %22 = vector.extract_strided_slice %19 {offsets = [0, 1, 0], sizes = [16, 16, 4], strides = [1, 1, 1]} : vector<16x18x4xf32> to vector<16x16x4xf32>
    %23 = vector.shape_cast %22 : vector<16x16x4xf32> to vector<256x4xf32>
    %24 = vector.extract_strided_slice %19 {offsets = [0, 2, 0], sizes = [16, 16, 4], strides = [1, 1, 1]} : vector<16x18x4xf32> to vector<16x16x4xf32>
    %25 = vector.shape_cast %24 : vector<16x16x4xf32> to vector<256x4xf32>
    %26 = tpu.concatenate %7, %9, %11, %14, %16, %18, %21, %23, %25 in 1 : vector<256x4xf32>, vector<256x4xf32>, vector<256x4xf32>, vector<256x4xf32>, vector<256x4xf32>, vector<256x4xf32>, vector<256x4xf32>, vector<256x4xf32>, vector<256x4xf32> -> vector<256x36xf32>
    %c0_7 = arith.constant 0 : index
    %c0_8 = arith.constant 0 : index
    %27 = vector.load %arg4[%c0_7, %c0_8] : memref<36x128xf32, #tpu.memory_space<vmem>>, vector<36x128xf32>
    %cst = arith.constant dense<0.000000e+00> : vector<256x128xf32>
    %28 = tpu.matmul %26, %27, %cst {dimension_numbers = #tpu.dot_dimension_numbers<[1], [0], [0], [1], [0, 0, 1, 1], [], []>} : vector<256x36xf32>, vector<36x128xf32>, vector<256x128xf32> -> vector<256x128xf32>
    %c0_9 = arith.constant 0 : index
    %c0_10 = arith.constant 0 : index
    %29 = vector.load %arg5[%c0_9, %c0_10] : memref<1x128xf32, #tpu.memory_space<vmem>>, vector<1x128xf32>
    %30 = vector.broadcast %29 : vector<1x128xf32> to vector<256x128xf32>
    %31 = arith.addf %28, %30 : vector<256x128xf32>
    %cst_11 = arith.constant 0.000000e+00 : f32
    %32 = vector.broadcast %cst_11 : f32 to vector<256x128xf32>
    %33 = arith.maximumf %31, %32 : vector<256x128xf32>
    %34 = tpu.transpose %33, [1, 0] : vector<256x128xf32> -> vector<128x256xf32>
    %35 = vector.extract_strided_slice %34 {offsets = [0, 0], sizes = [8, 256], strides = [1, 1]} : vector<128x256xf32> to vector<8x256xf32>
    %c0_12 = arith.constant 0 : index
    %c0_13 = arith.constant 0 : index
    %c0_14 = arith.constant 0 : index
    %36 = vector.load %arg6[%c0_12, %c0_13, %c0_14] : memref<1x8x256xf32, #tpu.memory_space<vmem>>, vector<1x8x256xf32>
    %37 = vector.shape_cast %36 : vector<1x8x256xf32> to vector<8x256xf32>
    %38 = vector.shape_cast %35 : vector<8x256xf32> to vector<1x8x256xf32>
    tpu.vector_store %arg6[%c0_12, %c0_13, %c0_14], %38 {strides = array<i32>} : memref<1x8x256xf32, #tpu.memory_space<vmem>>, vector<1x8x256xf32>,
    return
  }
  func.func @transform_0(%arg0: i32, %arg1: i32) -> (i32, i32, i32, i32) {
    %c0_i32 = arith.constant 0 : i32
    %c0_i32_0 = arith.constant 0 : i32
    %c0_i32_1 = arith.constant 0 : i32
    return %arg0, %arg1, %c0_i32, %c0_i32_0 : i32, i32, i32, i32
  }
  func.func @transform_1(%arg0: i32, %arg1: i32) -> (i32, i32, i32, i32) {
    %c1_i32 = arith.constant 1 : i32
    %0 = arith.addi %arg1, %c1_i32 : i32
    %c8_i32 = arith.constant 8 : i32
    %1 = arith.muli %0, %c8_i32 : i32
    %c0_i32 = arith.constant 0 : i32
    %c0_i32_0 = arith.constant 0 : i32
    %c0_i32_1 = arith.constant 0 : i32
    return %arg0, %1, %c0_i32, %c0_i32_0 : i32, i32, i32, i32
  }
  func.func @transform_2(%arg0: i32, %arg1: i32) -> (i32, i32) {
    %c0_i32 = arith.constant 0 : i32
    %c0_i32_0 = arith.constant 0 : i32
    %c0_i32_1 = arith.constant 0 : i32
    return %c0_i32, %c0_i32_0 : i32, i32
  }
  func.func @transform_3(%arg0: i32, %arg1: i32) -> (i32, i32) {
    %c0_i32 = arith.constant 0 : i32
    %c0_i32_0 = arith.constant 0 : i32
    %c0_i32_1 = arith.constant 0 : i32
    return %c0_i32, %c0_i32_0 : i32, i32
  }
  func.func @transform_4(%arg0: i32, %arg1: i32) -> (i32, i32, i32) {
    %c0_i32 = arith.constant 0 : i32
    %c0_i32_0 = arith.constant 0 : i32
    return %arg0, %c0_i32, %arg1 : i32, i32, i32
  }
}

</mosaic_0001>

<llo_original>
// kernel: tpu_custom_call.1
$region0: #{tpu_custom_call.1}
  #allocation0 [shape = 'u32[]', space=smem, size = 0x4, offset = 0x4, fixed_abs, tag = 'smem constant byte address 0x4 - core index']
  #allocation1 [shape = 'u32[144,128]{1,0:T(1,128)}', space=vmem, size = 0x12000, scoped, tag = 'internal scratch']
  %s0 = inlined_call_operand.vmem [shape: f32[2,32,18,4], index: 0, kind: input, shape index: {}]
  %s1 = inlined_call_operand.vmem [shape: f32[2,32,18,4], index: 1, kind: input, shape index: {}]
  %s2 = inlined_call_operand.vmem [shape: f32[36,128], index: 2, kind: input, shape index: {}]
  %s3 = inlined_call_operand.vmem [shape: f32[1,128], index: 3, kind: input, shape index: {}]
  %s4 = inlined_call_operand.hbm [shape: f32[2,8,256], index: 4, kind: output, shape index: {}]
  %s5 = sld [smem:[#allocation0]]
  $region49: #{tpu_custom_call.1} parent=0
    _
  %s7 = ssub.s32 1, %s5
  %s8 = scalar_select 0, %s7, %s5
  $region1: #{tpu_custom_call.1} parent=0
    #allocation2 [shape = 'u8[16384]{0}', space=vmem, size = 0x4000, scoped, tag = 'output window, operand 0']
    #allocation3 [shape = 's32[2]{0}', space=sflag, size = 0x8, scoped, tag = 'scoped memory for tpu_custom_call.1']
    %9 = vsyncpa [#allocation3], 0
    %s10 = scalar_lea.sflag [#allocation3], 1
    %11 = vsyncpa %s10, 0
    loop: start=0, step=1, limit=4
    $region2: #{tpu_custom_call.1} parent=1 // loop_pre_header
      _
    $region3: #{tpu_custom_call.1} parent=1 // loop_header
      %s13 = sphi 0, %s17
      %p14 = scmp.ge.s32.totalorder %s13, 4
      %s20 = sphi 0, %s32
      %s21 = sphi 0, %s28
      %s22 = sphi 0, %s20
      %s23 = sphi 0, %s21
      %s24 = sphi 0, %s22
      %s25 = sphi 0, %s23
      %s37 = sphi 0, %s39
      %s40 = sphi 0, %s37
      %s41 = sphi 0, %s40
      %s57 = sphi 0, %s41
      %s69 = sphi 0, %s71
      %s72 = sphi 0, %s69
      %s73 = sphi 0, %s72
      %s89 = sphi 0, %s73
      %s93 = sphi 0, %s93
      %s95 = sphi 0, %s93
      %s96 = sphi 0, %s95
      %s110 = sphi 0, %s96
      %s114 = sphi 0, %s114
      %s116 = sphi 0, %s114
      %s117 = sphi 0, %s116
      %s131 = sphi 0, %s117
      %s139 = sphi 0, %s141
      %s142 = sphi 0, %s139
      %s143 = sphi 0, %s142
      %s159 = sphi 0, %s143
    $region4: #{tpu_custom_call.1} parent=1 // loop_header_branch
      %16 = sbr.rel (%p14) target = $region8
    $region5: #{tpu_custom_call.1} parent=1 // loop_body
      %s18 = ssub.s32 %s13, 1
      %s19 = ssub.s32 %s13, 2
      %s26 = sadd.s32 1, %s21
      %p27 = scmp.ge.s32.totalorder %s26, 1
      %s28 = scalar_select %p27, 0, %s26
      %s29 = sadd.s32 1, %s20
      %s30 = scalar_select %p27, %s29, %s20
      %p31 = scmp.ge.s32.totalorder %s30, 2
      %s32 = scalar_select %p31, 0, %s30
      %s33 = ssub.s32 %s20, %s32
      %s34 = ssub.s32 %s21, %s28
      %s35 = sor.u32 %s33, %s34
      %p36 = scmp.eq.s32.totalorder %s35, 0
      %s38 = sadd.s32 %s37, 1
      %s39 = scalar_select %p36, %s37, %s38
      %p42 = pneg %p36
      %p43 = scmp.eq.s32.totalorder %s13, 1
      %p44 = por %p42, %p43
      %p45 = scmp.ne.s32.totalorder %s37, %s40
      %p46 = scmp.eq.s32.totalorder %s13, 0
      %p47 = por %p45, %p46
      %p48 = scmp.ne.s32.totalorder %s37, %s40
      %p49 = scmp.eq.s32.totalorder %s18, 1
      %p50 = por %p48, %p49
      %p51 = scmp.ne.s32.totalorder %s40, %s41
      %p52 = scmp.eq.s32.totalorder %s18, 0
      %p53 = por %p51, %p52
      %p54 = scmp.ne.s32.totalorder %s40, %s41
      %p55 = scmp.eq.s32.totalorder %s19, 1
      %p56 = por %p54, %p55
      %p58 = scmp.ne.s32.totalorder %s41, %s57
      %p59 = scmp.eq.s32.totalorder %s19, 0
      %p60 = por %p58, %p59
      %s61 = sadd.s32 %s21, 1
      %s62 = smul.u32 %s61, 8
      %s63 = sadd.s32 %s28, 1
      %s64 = smul.u32 %s63, 8
      %s65 = ssub.s32 %s20, %s32
      %s66 = ssub.s32 %s62, %s64
      %s67 = sor.u32 %s65, %s66
      %p68 = scmp.eq.s32.totalorder %s67, 0
      %s70 = sadd.s32 %s69, 1
      %s71 = scalar_select %p68, %s69, %s70
      %p74 = pneg %p68
      %p75 = scmp.eq.s32.totalorder %s13, 1
      %p76 = por %p74, %p75
      %p77 = scmp.ne.s32.totalorder %s69, %s72
      %p78 = scmp.eq.s32.totalorder %s13, 0
      %p79 = por %p77, %p78
      %p80 = scmp.ne.s32.totalorder %s69, %s72
      %p81 = scmp.eq.s32.totalorder %s18, 1
      %p82 = por %p80, %p81
      %p83 = scmp.ne.s32.totalorder %s72, %s73
      %p84 = scmp.eq.s32.totalorder %s18, 0
      %p85 = por %p83, %p84
      %p86 = scmp.ne.s32.totalorder %s72, %s73
      %p87 = scmp.eq.s32.totalorder %s19, 1
      %p88 = por %p86, %p87
      %p90 = scmp.ne.s32.totalorder %s73, %s89
      %p91 = scmp.eq.s32.totalorder %s19, 0
      %p92 = por %p90, %p91
      %s94 = sadd.s32 %s93, 1
      %p97 = scmp.eq.s32.totalorder %s13, 1
      %p98 = scmp.ne.s32.totalorder %s93, %s95
      %p99 = scmp.eq.s32.totalorder %s13, 0
      %p100 = por %p98, %p99
      %p101 = scmp.ne.s32.totalorder %s93, %s95
      %p102 = scmp.eq.s32.totalorder %s18, 1
      %p103 = por %p101, %p102
      %p104 = scmp.ne.s32.totalorder %s95, %s96
      %p105 = scmp.eq.s32.totalorder %s18, 0
      %p106 = por %p104, %p105
      %p107 = scmp.ne.s32.totalorder %s95, %s96
      %p108 = scmp.eq.s32.totalorder %s19, 1
      %p109 = por %p107, %p108
      %p111 = scmp.ne.s32.totalorder %s96, %s110
      %p112 = scmp.eq.s32.totalorder %s19, 0
      %p113 = por %p111, %p112
      %s115 = sadd.s32 %s114, 1
      %p118 = scmp.eq.s32.totalorder %s13, 1
      %p119 = scmp.ne.s32.totalorder %s114, %s116
      %p120 = scmp.eq.s32.totalorder %s13, 0
      %p121 = por %p119, %p120
      %p122 = scmp.ne.s32.totalorder %s114, %s116
      %p123 = scmp.eq.s32.totalorder %s18, 1
      %p124 = por %p122, %p123
      %p125 = scmp.ne.s32.totalorder %s116, %s117
      %p126 = scmp.eq.s32.totalorder %s18, 0
      %p127 = por %p125, %p126
      %p128 = scmp.ne.s32.totalorder %s116, %s117
      %p129 = scmp.eq.s32.totalorder %s19, 1
      %p130 = por %p128, %p129
      %p132 = scmp.ne.s32.totalorder %s117, %s131
      %p133 = scmp.eq.s32.totalorder %s19, 0
      %p134 = por %p132, %p133
      %s135 = ssub.s32 %s20, %s32
      %s136 = ssub.s32 %s21, %s28
      %s137 = sor.u32 %s135, %s136
      %p138 = scmp.eq.s32.totalorder %s137, 0
      %s140 = sadd.s32 %s139, 1
      %s141 = scalar_select %p138, %s139, %s140
      %p144 = pneg %p138
      %p145 = scmp.eq.s32.totalorder %s13, 1
      %p146 = por %p144, %p145
      %p147 = scmp.ne.s32.totalorder %s139, %s142
      %p148 = scmp.eq.s32.totalorder %s13, 0
      %p149 = por %p147, %p148
      %p150 = scmp.ne.s32.totalorder %s139, %s142
      %p151 = scmp.eq.s32.totalorder %s18, 1
      %p152 = por %p150, %p151
      %p153 = scmp.ne.s32.totalorder %s142, %s143
      %p154 = scmp.eq.s32.totalorder %s18, 0
      %p155 = por %p153, %p154
      %p156 = scmp.ne.s32.totalorder %s142, %s143
      %p157 = scmp.eq.s32.totalorder %s19, 1
      %p158 = por %p156, %p157
      %p160 = scmp.ne.s32.totalorder %s143, %s159
      %p161 = scmp.eq.s32.totalorder %s19, 0
      %p162 = por %p160, %p161
      %p163 = scmp.le.s32.totalorder 1, %s13
      %p164 = scmp.lt.s32.totalorder %s13, 3
      %p165 = pnand %p163, %p164
      %p166 = pneg %p165
      // Predicated region
      $region9: #{tpu_custom_call.1} parent=5 // pred_check
        _
      $region10: #{tpu_custom_call.1} parent=5 // pred_check_branch
        %168 = sbr.rel (%p165) target = $region12
      $region11: #{tpu_custom_call.1} parent=5 // pred_region
        %s169 = ssub.s32 %s13, 1
        // Predicated region
        $region13: #{tpu_custom_call.1} parent=11 // pred_check
          %p170 = pneg %p106
        $region14: #{tpu_custom_call.1} parent=11 // pred_check_branch
          %172 = sbr.rel (%p170) target = $region16
        $region15: #{tpu_custom_call.1} parent=11 // pred_region
          _
        $region16: #{tpu_custom_call.1} parent=11 // pred_fallthru
          _
        // Predicated region
        $region17: #{tpu_custom_call.1} parent=11 // pred_check
          %p173 = pneg %p127
        $region18: #{tpu_custom_call.1} parent=11 // pred_check_branch
          %175 = sbr.rel (%p173) target = $region20
        $region19: #{tpu_custom_call.1} parent=11 // pred_region
          _
        $region20: #{tpu_custom_call.1} parent=11 // pred_fallthru
          _
      $region12: #{tpu_custom_call.1} parent=5 // pred_fallthru
        _
      %p176 = scmp.lt.s32.totalorder %s13, 2
      // Predicated region
      $region21: #{tpu_custom_call.1} parent=5 // pred_check
        %p177 = pneg %p176
      $region22: #{tpu_custom_call.1} parent=5 // pred_check_branch
        %179 = sbr.rel (%p177) target = $region24
      $region23: #{tpu_custom_call.1} parent=5 // pred_region
        // Predicated region
        $region25: #{tpu_custom_call.1} parent=23 // pred_check
          %p180 = pneg %p47
        $region26: #{tpu_custom_call.1} parent=23 // pred_check_branch
          %182 = sbr.rel (%p180) target = $region28
        $region27: #{tpu_custom_call.1} parent=23 // pred_region
          %s183 = smul.u32 16, %s21
          %p184 = scmp.lt.s32.totalorder %s20, 1
          %s185 = scalar_select %p184, %s20, 1
          %p186 = scmp.lt.s32.totalorder %s183, 31
          %s187 = scalar_select %p186, %s183, 31
          %s188 = smul.addr %s187, 3
          %s189 = smul.addr %s185, 96
          %s190 = sadd.s32 %s188, %s189
          %s191 = smul.addr %s190, 8
          %s192 = scalar_lea.vmem %s0, %s191
          %s193 = smul.u32 16, %s21
        $region28: #{tpu_custom_call.1} parent=23 // pred_fallthru
          _
        // Predicated region
        $region29: #{tpu_custom_call.1} parent=23 // pred_check
          %p194 = pneg %p79
        $region30: #{tpu_custom_call.1} parent=23 // pred_check_branch
          %196 = sbr.rel (%p194) target = $region32
        $region31: #{tpu_custom_call.1} parent=23 // pred_region
          %s197 = sadd.s32 %s21, 1
          %s198 = smul.u32 %s197, 8
          %s199 = smul.u32 2, %s198
          %p200 = scmp.lt.s32.totalorder %s20, 1
          %s201 = scalar_select %p200, %s20, 1
          %p202 = scmp.lt.s32.totalorder %s199, 31
          %s203 = scalar_select %p202, %s199, 31
          %s204 = smul.addr %s203, 3
          %s205 = smul.addr %s201, 96
          %s206 = sadd.s32 %s204, %s205
          %s207 = smul.addr %s206, 8
          %s208 = scalar_lea.vmem %s1, %s207
          %s209 = sadd.s32 %s21, 1
          %s210 = smul.u32 %s209, 8
          %s211 = smul.u32 2, %s210
        $region32: #{tpu_custom_call.1} parent=23 // pred_fallthru
          _
      $region24: #{tpu_custom_call.1} parent=5 // pred_fallthru
        _
      %p212 = scmp.le.s32.totalorder 1, %s13
      %p213 = scmp.lt.s32.totalorder %s13, 3
      %p214 = pnand %p212, %p213
      %p215 = pneg %p214
      // Predicated region
      $region33: #{tpu_custom_call.1} parent=5 // pred_check
        _
      $region34: #{tpu_custom_call.1} parent=5 // pred_check_branch
        %217 = sbr.rel (%p214) target = $region36
      $region35: #{tpu_custom_call.1} parent=5 // pred_region
        %s218 = ssub.s32 %s13, 1
        %s219 = smul.u32 16, %s23
        %p220 = scmp.lt.s32.totalorder %s22, 1
        %s221 = scalar_select %p220, %s22, 1
        %p222 = scmp.lt.s32.totalorder %s219, 31
        %s223 = scalar_select %p222, %s219, 31
        %s224 = smul.addr %s223, 3
        %s225 = smul.addr %s221, 96
        %s226 = sadd.s32 %s224, %s225
        %s227 = smul.addr %s226, 8
        %s228 = scalar_lea.vmem %s0, %s227
        %p229 = pneg %p53
        %p230 = pneg %p50
        %s231 = sadd.s32 %s23, 1
        %s232 = smul.u32 %s231, 8
        %s233 = smul.u32 2, %s232
        %p234 = scmp.lt.s32.totalorder %s22, 1
        %s235 = scalar_select %p234, %s22, 1
        %p236 = scmp.lt.s32.totalorder %s233, 31
        %s237 = scalar_select %p236, %s233, 31
        %s238 = smul.addr %s237, 3
        %s239 = smul.addr %s235, 96
        %s240 = sadd.s32 %s238, %s239
        %s241 = smul.addr %s240, 8
        %s242 = scalar_lea.vmem %s1, %s241
        %p243 = pneg %p85
        %p244 = pneg %p82
        %p245 = pneg %p106
        %p246 = pneg %p103
        %p247 = pneg %p127
        %p248 = pneg %p124
        %p249 = pneg %p155
        %p250 = pneg %p152
        %s251 = sand.u32 %s142, 1
        %s252 = scalar_lea.sflag [#allocation3], %s251
        %s253 = sand.u32 %s142, 1
        %s254 = smul.addr %s253, 16
        %s255 = scalar_lea.vmem [#allocation2], %s254
        %s256 = smul.u32 16, %s23
        %p257 = scmp.lt.s32.totalorder %s22, 1
        %s258 = scalar_select %p257, %s22, 1
        %p259 = scmp.lt.s32.totalorder %s256, 31
        %s260 = scalar_select %p259, %s256, 31
        %s261 = smul.addr %s260, 3
        %s262 = smul.addr %s258, 96
        %s263 = sadd.s32 %s261, %s262
        %s264 = smul.addr %s263, 8
        %s265 = scalar_lea.vmem %s0, %s264
        %s266 = smul.u32 16, %s23
        %s267 = sadd.s32 %s23, 1
        %s268 = smul.u32 %s267, 8
        %s269 = smul.u32 2, %s268
        %p270 = scmp.lt.s32.totalorder %s22, 1
        %s271 = scalar_select %p270, %s22, 1
        %p272 = scmp.lt.s32.totalorder %s269, 31
        %s273 = scalar_select %p272, %s269, 31
        %s274 = smul.addr %s273, 3
        %s275 = smul.addr %s271, 96
        %s276 = sadd.s32 %s274, %s275
        %s277 = smul.addr %s276, 8
        %s278 = scalar_lea.vmem %s1, %s277
        %s279 = sadd.s32 %s23, 1
        %s280 = smul.u32 %s279, 8
        %s281 = smul.u32 2, %s280
        %s282 = smul.u32 2, %s23
        %v283 = vld [vmem:[%s265] sm:$0xff]
        %v284 = vld [vmem:[%s265 + $0x8] sm:$0xff]
        %v285 = vld [vmem:[%s265 + $0x10] sm:$0x3]
        %v286 = vld [vmem:[%s265 + $0x18] sm:$0xff]
        %v287 = vld [vmem:[%s265 + $0x20] sm:$0xff]
        %v288 = vld [vmem:[%s265 + $0x28] sm:$0x3]
        %v289 = vld [vmem:[%s265 + $0x30] sm:$0xff]
        %v290 = vld [vmem:[%s265 + $0x38] sm:$0xff]
        %v291 = vld [vmem:[%s265 + $0x40] sm:$0x3]
        %v292 = vld [vmem:[%s265 + $0x48] sm:$0xff]
        %v293 = vld [vmem:[%s265 + $0x50] sm:$0xff]
        %v294 = vld [vmem:[%s265 + $0x58] sm:$0x3]
        %v295 = vld [vmem:[%s265 + $0x60] sm:$0xff]
        %v296 = vld [vmem:[%s265 + $0x68] sm:$0xff]
        %v297 = vld [vmem:[%s265 + $0x70] sm:$0x3]
        %v298 = vld [vmem:[%s265 + $0x78] sm:$0xff]
        %v299 = vld [vmem:[%s265 + $0x80] sm:$0xff]
        %v300 = vld [vmem:[%s265 + $0x88] sm:$0x3]
        %v301 = vld [vmem:[%s265 + $0x90] sm:$0xff]
        %v302 = vld [vmem:[%s265 + $0x98] sm:$0xff]
        %v303 = vld [vmem:[%s265 + $0xa0] sm:$0x3]
        %v304 = vld [vmem:[%s265 + $0xa8] sm:$0xff]
        %v305 = vld [vmem:[%s265 + $0xb0] sm:$0xff]
        %v306 = vld [vmem:[%s265 + $0xb8] sm:$0x3]
        %v307 = vld [vmem:[%s265 + $0xc0] sm:$0xff]
        %v308 = vld [vmem:[%s265 + $0xc8] sm:$0xff]
        %v309 = vld [vmem:[%s265 + $0xd0] sm:$0x3]
        %v310 = vld [vmem:[%s265 + $0xd8] sm:$0xff]
        %v311 = vld [vmem:[%s265 + $0xe0] sm:$0xff]
        %v312 = vld [vmem:[%s265 + $0xe8] sm:$0x3]
        %v313 = vld [vmem:[%s265 + $0xf0] sm:$0xff]
        %v314 = vld [vmem:[%s265 + $0xf8] sm:$0xff]
        %v315 = vld [vmem:[%s265 + $0x100] sm:$0x3]
        %v316 = vld [vmem:[%s265 + $0x108] sm:$0xff]
        %v317 = vld [vmem:[%s265 + $0x110] sm:$0xff]
        %v318 = vld [vmem:[%s265 + $0x118] sm:$0x3]
        %v319 = vld [vmem:[%s265 + $0x120] sm:$0xff]
        %v320 = vld [vmem:[%s265 + $0x128] sm:$0xff]
        %v321 = vld [vmem:[%s265 + $0x130] sm:$0x3]
        %v322 = vld [vmem:[%s265 + $0x138] sm:$0xff]
        %v323 = vld [vmem:[%s265 + $0x140] sm:$0xff]
        %v324 = vld [vmem:[%s265 + $0x148] sm:$0x3]
        %v325 = vld [vmem:[%s265 + $0x150] sm:$0xff]
        %v326 = vld [vmem:[%s265 + $0x158] sm:$0xff]
        %v327 = vld [vmem:[%s265 + $0x160] sm:$0x3]
        %v328 = vld [vmem:[%s265 + $0x168] sm:$0xff]
        %v329 = vld [vmem:[%s265 + $0x170] sm:$0xff]
        %v330 = vld [vmem:[%s265 + $0x178] sm:$0x3]
        %v331 = vld [vmem:[%s278] sm:$0xff]
        %v332 = vld [vmem:[%s278 + $0x8] sm:$0xff]
        %v333 = vld [vmem:[%s278 + $0x10] sm:$0x3]
        %v334 = vld [vmem:[%s278 + $0x18] sm:$0xff]
        %v335 = vld [vmem:[%s278 + $0x20] sm:$0xff]
        %v336 = vld [vmem:[%s278 + $0x28] sm:$0x3]
        %vm385 = vcmask 1046528
        %v386 = vrot.slane %v283, 1
        %v387 = vrot.slane %v284, 1
        %v388 = vsel %vm385, %v386, %v387
        %v389 = vrot.slane %v285, 1
        %v390 = vsel %vm385, %v387, %v389
        %v391 = vrot.slane %v286, 1
        %v392 = vrot.slane %v287, 1
        %v393 = vsel %vm385, %v391, %v392
        %v394 = vrot.slane %v288, 1
        %v395 = vsel %vm385, %v392, %v394
        %v396 = vrot.slane %v289, 1
        %v397 = vrot.slane %v290, 1
        %v398 = vsel %vm385, %v396, %v397
        %v399 = vrot.slane %v291, 1
        %v400 = vsel %vm385, %v397, %v399
        %v401 = vrot.slane %v292, 1
        %v402 = vrot.slane %v293, 1
        %v403 = vsel %vm385, %v401, %v402
        %v404 = vrot.slane %v294, 1
        %v405 = vsel %vm385, %v402, %v404
        %v406 = vrot.slane %v295, 1
        %v407 = vrot.slane %v296, 1
        %v408 = vsel %vm385, %v406, %v407
        %v409 = vrot.slane %v297, 1
        %v410 = vsel %vm385, %v407, %v409
        %v411 = vrot.slane %v298, 1
        %v412 = vrot.slane %v299, 1
        %v413 = vsel %vm385, %v411, %v412
        %v414 = vrot.slane %v300, 1
        %v415 = vsel %vm385, %v412, %v414
        %v416 = vrot.slane %v301, 1
        %v417 = vrot.slane %v302, 1
        %v418 = vsel %vm385, %v416, %v417
        %v419 = vrot.slane %v303, 1
        %v420 = vsel %vm385, %v417, %v419
        %v421 = vrot.slane %v304, 1
        %v422 = vrot.slane %v305, 1
        %v423 = vsel %vm385, %v421, %v422
        %v424 = vrot.slane %v306, 1
        %v425 = vsel %vm385, %v422, %v424
        %v426 = vrot.slane %v307, 1
        %v427 = vrot.slane %v308, 1
        %v428 = vsel %vm385, %v426, %v427
        %v429 = vrot.slane %v309, 1
        %v430 = vsel %vm385, %v427, %v429
        %v431 = vrot.slane %v310, 1
        %v432 = vrot.slane %v311, 1
        %v433 = vsel %vm385, %v431, %v432
        %v434 = vrot.slane %v312, 1
        %v435 = vsel %vm385, %v432, %v434
        %v436 = vrot.slane %v313, 1
        %v437 = vrot.slane %v314, 1
        %v438 = vsel %vm385, %v436, %v437
        %v439 = vrot.slane %v315, 1
        %v440 = vsel %vm385, %v437, %v439
        %v441 = vrot.slane %v316, 1
        %v442 = vrot.slane %v317, 1
        %v443 = vsel %vm385, %v441, %v442
        %v444 = vrot.slane %v318, 1
        %v445 = vsel %vm385, %v442, %v444
        %v446 = vrot.slane %v319, 1
        %v447 = vrot.slane %v320, 1
        %v448 = vsel %vm385, %v446, %v447
        %v449 = vrot.slane %v321, 1
        %v450 = vsel %vm385, %v447, %v449
        %v451 = vrot.slane %v322, 1
        %v452 = vrot.slane %v323, 1
        %v453 = vsel %vm385, %v451, %v452
        %v454 = vrot.slane %v324, 1
        %v455 = vsel %vm385, %v452, %v454
        %v456 = vrot.slane %v325, 1
        %v457 = vrot.slane %v326, 1
        %v458 = vsel %vm385, %v456, %v457
        %v459 = vrot.slane %v327, 1
        %v460 = vsel %vm385, %v457, %v459
        %v461 = vrot.slane %v328, 1
        %v462 = vrot.slane %v329, 1
        %v463 = vsel %vm385, %v461, %v462
        %v464 = vrot.slane %v330, 1
        %v465 = vsel %vm385, %v462, %v464
        %vm466 = vcmask 1045504
        %v467 = vrot.slane %v283, 2
        %v468 = vrot.slane %v284, 2
        %v469 = vsel %vm466, %v467, %v468
        %v470 = vrot.slane %v285, 2
        %v471 = vsel %vm466, %v468, %v470
        %v472 = vrot.slane %v286, 2
        %v473 = vrot.slane %v287, 2
        %v474 = vsel %vm466, %v472, %v473
        %v475 = vrot.slane %v288, 2
        %v476 = vsel %vm466, %v473, %v475
        %v477 = vrot.slane %v289, 2
        %v478 = vrot.slane %v290, 2
        %v479 = vsel %vm466, %v477, %v478
        %v480 = vrot.slane %v291, 2
        %v481 = vsel %vm466, %v478, %v480
        %v482 = vrot.slane %v292, 2
        %v483 = vrot.slane %v293, 2
        %v484 = vsel %vm466, %v482, %v483
        %v485 = vrot.slane %v294, 2
        %v486 = vsel %vm466, %v483, %v485
        %v487 = vrot.slane %v295, 2
        %v488 = vrot.slane %v296, 2
        %v489 = vsel %vm466, %v487, %v488
        %v490 = vrot.slane %v297, 2
        %v491 = vsel %vm466, %v488, %v490
        %v492 = vrot.slane %v298, 2
        %v493 = vrot.slane %v299, 2
        %v494 = vsel %vm466, %v492, %v493
        %v495 = vrot.slane %v300, 2
        %v496 = vsel %vm466, %v493, %v495
        %v497 = vrot.slane %v301, 2
        %v498 = vrot.slane %v302, 2
        %v499 = vsel %vm466, %v497, %v498
        %v500 = vrot.slane %v303, 2
        %v501 = vsel %vm466, %v498, %v500
        %v502 = vrot.slane %v304, 2
        %v503 = vrot.slane %v305, 2
        %v504 = vsel %vm466, %v502, %v503
        %v505 = vrot.slane %v306, 2
        %v506 = vsel %vm466, %v503, %v505
        %v507 = vrot.slane %v307, 2
        %v508 = vrot.slane %v308, 2
        %v509 = vsel %vm466, %v507, %v508
        %v510 = vrot.slane %v309, 2
        %v511 = vsel %vm466, %v508, %v510
        %v512 = vrot.slane %v310, 2
        %v513 = vrot.slane %v311, 2
        %v514 = vsel %vm466, %v512, %v513
        %v515 = vrot.slane %v312, 2
        %v516 = vsel %vm466, %v513, %v515
        %v517 = vrot.slane %v313, 2
        %v518 = vrot.slane %v314, 2
        %v519 = vsel %vm466, %v517, %v518
        %v520 = vrot.slane %v315, 2
        %v521 = vsel %vm466, %v518, %v520
        %v522 = vrot.slane %v316, 2
        %v523 = vrot.slane %v317, 2
        %v524 = vsel %vm466, %v522, %v523
        %v525 = vrot.slane %v318, 2
        %v526 = vsel %vm466, %v523, %v525
        %v527 = vrot.slane %v319, 2
        %v528 = vrot.slane %v320, 2
        %v529 = vsel %vm466, %v527, %v528
        %v530 = vrot.slane %v321, 2
        %v531 = vsel %vm466, %v528, %v530
        %v532 = vrot.slane %v322, 2
        %v533 = vrot.slane %v323, 2
        %v534 = vsel %vm466, %v532, %v533
        %v535 = vrot.slane %v324, 2
        %v536 = vsel %vm466, %v533, %v535
        %v537 = vrot.slane %v325, 2
        %v538 = vrot.slane %v326, 2
        %v539 = vsel %vm466, %v537, %v538
        %v540 = vrot.slane %v327, 2
        %v541 = vsel %vm466, %v538, %v540
        %v542 = vrot.slane %v328, 2
        %v543 = vrot.slane %v329, 2
        %v544 = vsel %vm466, %v542, %v543
        %v545 = vrot.slane %v330, 2
        %v546 = vsel %vm466, %v543, %v545
        %v550 = vrot.slane %v331, 1
        %v551 = vrot.slane %v332, 1
        %v552 = vsel %vm385, %v550, %v551
        %v553 = vrot.slane %v333, 1
        %v554 = vsel %vm385, %v551, %v553
        %v555 = vrot.slane %v331, 2
        %v556 = vrot.slane %v332, 2
        %v557 = vsel %vm466, %v555, %v556
        %v558 = vrot.slane %v333, 2
        %v559 = vsel %vm466, %v556, %v558
        %v563 = vrot.slane %v334, 1
        %v564 = vrot.slane %v335, 1
        %v565 = vsel %vm385, %v563, %v564
        %v566 = vrot.slane %v336, 1
        %v567 = vsel %vm385, %v564, %v566
        %v568 = vrot.slane %v334, 2
        %v569 = vrot.slane %v335, 2
        %v570 = vsel %vm466, %v568, %v569
        %v571 = vrot.slane %v336, 2
        %v572 = vsel %vm466, %v569, %v571
        %573 = vrot.lane.b32.xlu0 %v388, 4
        %v574 = vpop.permute.xlu0 %573
        %575 = vrot.lane.b32.xlu0 %v390, 4
        %v576 = vpop.permute.xlu0 %575
        %577 = vrot.lane.b32.xlu0 %v393, 4
        %v578 = vpop.permute.xlu0 %577
        %579 = vrot.lane.b32.xlu0 %v395, 4
        %v580 = vpop.permute.xlu0 %579
        %581 = vrot.lane.b32.xlu0 %v398, 4
        %v582 = vpop.permute.xlu0 %581
        %583 = vrot.lane.b32.xlu0 %v400, 4
        %v584 = vpop.permute.xlu0 %583
        %585 = vrot.lane.b32.xlu0 %v403, 4
        %v586 = vpop.permute.xlu0 %585
        %587 = vrot.lane.b32.xlu0 %v405, 4
        %v588 = vpop.permute.xlu0 %587
        %589 = vrot.lane.b32.xlu0 %v408, 4
        %v590 = vpop.permute.xlu0 %589
        %591 = vrot.lane.b32.xlu0 %v410, 4
        %v592 = vpop.permute.xlu0 %591
        %593 = vrot.lane.b32.xlu0 %v413, 4
        %v594 = vpop.permute.xlu0 %593
        %595 = vrot.lane.b32.xlu0 %v415, 4
        %v596 = vpop.permute.xlu0 %595
        %597 = vrot.lane.b32.xlu0 %v418, 4
        %v598 = vpop.permute.xlu0 %597
        %599 = vrot.lane.b32.xlu0 %v420, 4
        %v600 = vpop.permute.xlu0 %599
        %601 = vrot.lane.b32.xlu0 %v423, 4
        %v602 = vpop.permute.xlu0 %601
        %603 = vrot.lane.b32.xlu0 %v425, 4
        %v604 = vpop.permute.xlu0 %603
        %605 = vrot.lane.b32.xlu0 %v428, 4
        %v606 = vpop.permute.xlu0 %605
        %607 = vrot.lane.b32.xlu0 %v430, 4
        %v608 = vpop.permute.xlu0 %607
        %609 = vrot.lane.b32.xlu0 %v433, 4
        %v610 = vpop.permute.xlu0 %609
        %611 = vrot.lane.b32.xlu0 %v435, 4
        %v612 = vpop.permute.xlu0 %611
        %613 = vrot.lane.b32.xlu0 %v438, 4
        %v614 = vpop.permute.xlu0 %613
        %615 = vrot.lane.b32.xlu0 %v440, 4
        %v616 = vpop.permute.xlu0 %615
        %617 = vrot.lane.b32.xlu0 %v443, 4
        %v618 = vpop.permute.xlu0 %617
        %619 = vrot.lane.b32.xlu0 %v445, 4
        %v620 = vpop.permute.xlu0 %619
        %621 = vrot.lane.b32.xlu0 %v448, 4
        %v622 = vpop.permute.xlu0 %621
        %623 = vrot.lane.b32.xlu0 %v450, 4
        %v624 = vpop.permute.xlu0 %623
        %625 = vrot.lane.b32.xlu0 %v453, 4
        %v626 = vpop.permute.xlu0 %625
        %627 = vrot.lane.b32.xlu0 %v455, 4
        %v628 = vpop.permute.xlu0 %627
        %629 = vrot.lane.b32.xlu0 %v458, 4
        %v630 = vpop.permute.xlu0 %629
        %631 = vrot.lane.b32.xlu0 %v460, 4
        %v632 = vpop.permute.xlu0 %631
        %633 = vrot.lane.b32.xlu0 %v463, 4
        %v634 = vpop.permute.xlu0 %633
        %635 = vrot.lane.b32.xlu0 %v465, 4
        %v636 = vpop.permute.xlu0 %635
        %669 = vrot.lane.b32.xlu0 %v469, 8
        %v670 = vpop.permute.xlu0 %669
        %671 = vrot.lane.b32.xlu0 %v471, 8
        %v672 = vpop.permute.xlu0 %671
        %673 = vrot.lane.b32.xlu0 %v474, 8
        %v674 = vpop.permute.xlu0 %673
        %675 = vrot.lane.b32.xlu0 %v476, 8
        %v676 = vpop.permute.xlu0 %675
        %677 = vrot.lane.b32.xlu0 %v479, 8
        %v678 = vpop.permute.xlu0 %677
        %679 = vrot.lane.b32.xlu0 %v481, 8
        %v680 = vpop.permute.xlu0 %679
        %681 = vrot.lane.b32.xlu0 %v484, 8
        %v682 = vpop.permute.xlu0 %681
        %683 = vrot.lane.b32.xlu0 %v486, 8
        %v684 = vpop.permute.xlu0 %683
        %685 = vrot.lane.b32.xlu0 %v489, 8
        %v686 = vpop.permute.xlu0 %685
        %687 = vrot.lane.b32.xlu0 %v491, 8
        %v688 = vpop.permute.xlu0 %687
        %689 = vrot.lane.b32.xlu0 %v494, 8
        %v690 = vpop.permute.xlu0 %689
        %691 = vrot.lane.b32.xlu0 %v496, 8
        %v692 = vpop.permute.xlu0 %691
        %693 = vrot.lane.b32.xlu0 %v499, 8
        %v694 = vpop.permute.xlu0 %693
        %695 = vrot.lane.b32.xlu0 %v501, 8
        %v696 = vpop.permute.xlu0 %695
        %697 = vrot.lane.b32.xlu0 %v504, 8
        %v698 = vpop.permute.xlu0 %697
        %699 = vrot.lane.b32.xlu0 %v506, 8
        %v700 = vpop.permute.xlu0 %699
        %701 = vrot.lane.b32.xlu0 %v509, 8
        %v702 = vpop.permute.xlu0 %701
        %703 = vrot.lane.b32.xlu0 %v511, 8
        %v704 = vpop.permute.xlu0 %703
        %705 = vrot.lane.b32.xlu0 %v514, 8
        %v706 = vpop.permute.xlu0 %705
        %707 = vrot.lane.b32.xlu0 %v516, 8
        %v708 = vpop.permute.xlu0 %707
        %709 = vrot.lane.b32.xlu0 %v519, 8
        %v710 = vpop.permute.xlu0 %709
        %711 = vrot.lane.b32.xlu0 %v521, 8
        %v712 = vpop.permute.xlu0 %711
        %713 = vrot.lane.b32.xlu0 %v524, 8
        %v714 = vpop.permute.xlu0 %713
        %715 = vrot.lane.b32.xlu0 %v526, 8
        %v716 = vpop.permute.xlu0 %715
        %717 = vrot.lane.b32.xlu0 %v529, 8
        %v718 = vpop.permute.xlu0 %717
        %719 = vrot.lane.b32.xlu0 %v531, 8
        %v720 = vpop.permute.xlu0 %719
        %721 = vrot.lane.b32.xlu0 %v534, 8
        %v722 = vpop.permute.xlu0 %721
        %723 = vrot.lane.b32.xlu0 %v536, 8
        %v724 = vpop.permute.xlu0 %723
        %725 = vrot.lane.b32.xlu0 %v539, 8
        %v726 = vpop.permute.xlu0 %725
        %727 = vrot.lane.b32.xlu0 %v541, 8
        %v728 = vpop.permute.xlu0 %727
        %729 = vrot.lane.b32.xlu0 %v544, 8
        %v730 = vpop.permute.xlu0 %729
        %731 = vrot.lane.b32.xlu0 %v546, 8
        %v732 = vpop.permute.xlu0 %731
        %765 = vrot.lane.b32.xlu0 %v286, 12
        %v766 = vpop.permute.xlu0 %765
        %767 = vrot.lane.b32.xlu0 %v287, 12
        %v768 = vpop.permute.xlu0 %767
        %769 = vrot.lane.b32.xlu0 %v289, 12
        %v770 = vpop.permute.xlu0 %769
        %771 = vrot.lane.b32.xlu0 %v290, 12
        %v772 = vpop.permute.xlu0 %771
        %773 = vrot.lane.b32.xlu0 %v292, 12
        %v774 = vpop.permute.xlu0 %773
        %775 = vrot.lane.b32.xlu0 %v293, 12
        %v776 = vpop.permute.xlu0 %775
        %777 = vrot.lane.b32.xlu0 %v295, 12
        %v778 = vpop.permute.xlu0 %777
        %779 = vrot.lane.b32.xlu0 %v296, 12
        %v780 = vpop.permute.xlu0 %779
        %781 = vrot.lane.b32.xlu0 %v298, 12
        %v782 = vpop.permute.xlu0 %781
        %783 = vrot.lane.b32.xlu0 %v299, 12
        %v784 = vpop.permute.xlu0 %783
        %785 = vrot.lane.b32.xlu0 %v301, 12
        %v786 = vpop.permute.xlu0 %785
        %787 = vrot.lane.b32.xlu0 %v302, 12
        %v788 = vpop.permute.xlu0 %787
        %789 = vrot.lane.b32.xlu0 %v304, 12
        %v790 = vpop.permute.xlu0 %789
        %791 = vrot.lane.b32.xlu0 %v305, 12
        %v792 = vpop.permute.xlu0 %791
        %793 = vrot.lane.b32.xlu0 %v307, 12
        %v794 = vpop.permute.xlu0 %793
        %795 = vrot.lane.b32.xlu0 %v308, 12
        %v796 = vpop.permute.xlu0 %795
        %797 = vrot.lane.b32.xlu0 %v310, 12
        %v798 = vpop.permute.xlu0 %797
        %799 = vrot.lane.b32.xlu0 %v311, 12
        %v800 = vpop.permute.xlu0 %799
        %801 = vrot.lane.b32.xlu0 %v313, 12
        %v802 = vpop.permute.xlu0 %801
        %803 = vrot.lane.b32.xlu0 %v314, 12
        %v804 = vpop.permute.xlu0 %803
        %805 = vrot.lane.b32.xlu0 %v316, 12
        %v806 = vpop.permute.xlu0 %805
        %807 = vrot.lane.b32.xlu0 %v317, 12
        %v808 = vpop.permute.xlu0 %807
        %809 = vrot.lane.b32.xlu0 %v319, 12
        %v810 = vpop.permute.xlu0 %809
        %811 = vrot.lane.b32.xlu0 %v320, 12
        %v812 = vpop.permute.xlu0 %811
        %813 = vrot.lane.b32.xlu0 %v322, 12
        %v814 = vpop.permute.xlu0 %813
        %815 = vrot.lane.b32.xlu0 %v323, 12
        %v816 = vpop.permute.xlu0 %815
        %817 = vrot.lane.b32.xlu0 %v325, 12
        %v818 = vpop.permute.xlu0 %817
        %819 = vrot.lane.b32.xlu0 %v326, 12
        %v820 = vpop.permute.xlu0 %819
        %821 = vrot.lane.b32.xlu0 %v328, 12
        %v822 = vpop.permute.xlu0 %821
        %823 = vrot.lane.b32.xlu0 %v329, 12
        %v824 = vpop.permute.xlu0 %823
        %825 = vrot.lane.b32.xlu0 %v331, 12
        %v826 = vpop.permute.xlu0 %825
        %827 = vrot.lane.b32.xlu0 %v332, 12
        %v828 = vpop.permute.xlu0 %827
        %861 = vrot.lane.b32.xlu0 %v393, 16
        %v862 = vpop.permute.xlu0 %861
        %863 = vrot.lane.b32.xlu0 %v395, 16
        %v864 = vpop.permute.xlu0 %863
        %865 = vrot.lane.b32.xlu0 %v398, 16
        %v866 = vpop.permute.xlu0 %865
        %867 = vrot.lane.b32.xlu0 %v400, 16
        %v868 = vpop.permute.xlu0 %867
        %869 = vrot.lane.b32.xlu0 %v403, 16
        %v870 = vpop.permute.xlu0 %869
        %871 = vrot.lane.b32.xlu0 %v405, 16
        %v872 = vpop.permute.xlu0 %871
        %873 = vrot.lane.b32.xlu0 %v408, 16
        %v874 = vpop.permute.xlu0 %873
        %875 = vrot.lane.b32.xlu0 %v410, 16
        %v876 = vpop.permute.xlu0 %875
        %877 = vrot.lane.b32.xlu0 %v413, 16
        %v878 = vpop.permute.xlu0 %877
        %879 = vrot.lane.b32.xlu0 %v415, 16
        %v880 = vpop.permute.xlu0 %879
        %881 = vrot.lane.b32.xlu0 %v418, 16
        %v882 = vpop.permute.xlu0 %881
        %883 = vrot.lane.b32.xlu0 %v420, 16
        %v884 = vpop.permute.xlu0 %883
        %885 = vrot.lane.b32.xlu0 %v423, 16
        %v886 = vpop.permute.xlu0 %885
        %887 = vrot.lane.b32.xlu0 %v425, 16
        %v888 = vpop.permute.xlu0 %887
        %889 = vrot.lane.b32.xlu0 %v428, 16
        %v890 = vpop.permute.xlu0 %889
        %891 = vrot.lane.b32.xlu0 %v430, 16
        %v892 = vpop.permute.xlu0 %891
        %893 = vrot.lane.b32.xlu0 %v433, 16
        %v894 = vpop.permute.xlu0 %893
        %895 = vrot.lane.b32.xlu0 %v435, 16
        %v896 = vpop.permute.xlu0 %895
        %897 = vrot.lane.b32.xlu0 %v438, 16
        %v898 = vpop.permute.xlu0 %897
        %899 = vrot.lane.b32.xlu0 %v440, 16
        %v900 = vpop.permute.xlu0 %899
        %901 = vrot.lane.b32.xlu0 %v443, 16
        %v902 = vpop.permute.xlu0 %901
        %903 = vrot.lane.b32.xlu0 %v445, 16
        %v904 = vpop.permute.xlu0 %903
        %905 = vrot.lane.b32.xlu0 %v448, 16
        %v906 = vpop.permute.xlu0 %905
        %907 = vrot.lane.b32.xlu0 %v450, 16
        %v908 = vpop.permute.xlu0 %907
        %909 = vrot.lane.b32.xlu0 %v453, 16
        %v910 = vpop.permute.xlu0 %909
        %911 = vrot.lane.b32.xlu0 %v455, 16
        %v912 = vpop.permute.xlu0 %911
        %913 = vrot.lane.b32.xlu0 %v458, 16
        %v914 = vpop.permute.xlu0 %913
        %915 = vrot.lane.b32.xlu0 %v460, 16
        %v916 = vpop.permute.xlu0 %915
        %917 = vrot.lane.b32.xlu0 %v463, 16
        %v918 = vpop.permute.xlu0 %917
        %919 = vrot.lane.b32.xlu0 %v465, 16
        %v920 = vpop.permute.xlu0 %919
        %921 = vrot.lane.b32.xlu0 %v552, 16
        %v922 = vpop.permute.xlu0 %921
        %923 = vrot.lane.b32.xlu0 %v554, 16
        %v924 = vpop.permute.xlu0 %923
        %957 = vrot.lane.b32.xlu0 %v474, 20
        %v958 = vpop.permute.xlu0 %957
        %959 = vrot.lane.b32.xlu0 %v476, 20
        %v960 = vpop.permute.xlu0 %959
        %961 = vrot.lane.b32.xlu0 %v479, 20
        %v962 = vpop.permute.xlu0 %961
        %963 = vrot.lane.b32.xlu0 %v481, 20
        %v964 = vpop.permute.xlu0 %963
        %965 = vrot.lane.b32.xlu0 %v484, 20
        %v966 = vpop.permute.xlu0 %965
        %967 = vrot.lane.b32.xlu0 %v486, 20
        %v968 = vpop.permute.xlu0 %967
        %969 = vrot.lane.b32.xlu0 %v489, 20
        %v970 = vpop.permute.xlu0 %969
        %971 = vrot.lane.b32.xlu0 %v491, 20
        %v972 = vpop.permute.xlu0 %971
        %973 = vrot.lane.b32.xlu0 %v494, 20
        %v974 = vpop.permute.xlu0 %973
        %975 = vrot.lane.b32.xlu0 %v496, 20
        %v976 = vpop.permute.xlu0 %975
        %977 = vrot.lane.b32.xlu0 %v499, 20
        %v978 = vpop.permute.xlu0 %977
        %979 = vrot.lane.b32.xlu0 %v501, 20
        %v980 = vpop.permute.xlu0 %979
        %981 = vrot.lane.b32.xlu0 %v504, 20
        %v982 = vpop.permute.xlu0 %981
        %983 = vrot.lane.b32.xlu0 %v506, 20
        %v984 = vpop.permute.xlu0 %983
        %985 = vrot.lane.b32.xlu0 %v509, 20
        %v986 = vpop.permute.xlu0 %985
        %987 = vrot.lane.b32.xlu0 %v511, 20
        %v988 = vpop.permute.xlu0 %987
        %989 = vrot.lane.b32.xlu0 %v514, 20
        %v990 = vpop.permute.xlu0 %989
        %991 = vrot.lane.b32.xlu0 %v516, 20
        %v992 = vpop.permute.xlu0 %991
        %993 = vrot.lane.b32.xlu0 %v519, 20
        %v994 = vpop.permute.xlu0 %993
        %995 = vrot.lane.b32.xlu0 %v521, 20
        %v996 = vpop.permute.xlu0 %995
        %997 = vrot.lane.b32.xlu0 %v524, 20
        %v998 = vpop.permute.xlu0 %997
        %999 = vrot.lane.b32.xlu0 %v526, 20
        %v1000 = vpop.permute.xlu0 %999
        %1001 = vrot.lane.b32.xlu0 %v529, 20
        %v1002 = vpop.permute.xlu0 %1001
        %1003 = vrot.lane.b32.xlu0 %v531, 20
        %v1004 = vpop.permute.xlu0 %1003
        %1005 = vrot.lane.b32.xlu0 %v534, 20
        %v1006 = vpop.permute.xlu0 %1005
        %1007 = vrot.lane.b32.xlu0 %v536, 20
        %v1008 = vpop.permute.xlu0 %1007
        %1009 = vrot.lane.b32.xlu0 %v539, 20
        %v1010 = vpop.permute.xlu0 %1009
        %1011 = vrot.lane.b32.xlu0 %v541, 20
        %v1012 = vpop.permute.xlu0 %1011
        %1013 = vrot.lane.b32.xlu0 %v544, 20
        %v1014 = vpop.permute.xlu0 %1013
        %1015 = vrot.lane.b32.xlu0 %v546, 20
        %v1016 = vpop.permute.xlu0 %1015
        %1017 = vrot.lane.b32.xlu0 %v557, 20
        %v1018 = vpop.permute.xlu0 %1017
        %1019 = vrot.lane.b32.xlu0 %v559, 20
        %v1020 = vpop.permute.xlu0 %1019
        %1053 = vrot.lane.b32.xlu0 %v289, 24
        %v1054 = vpop.permute.xlu0 %1053
        %1055 = vrot.lane.b32.xlu0 %v290, 24
        %v1056 = vpop.permute.xlu0 %1055
        %1057 = vrot.lane.b32.xlu0 %v292, 24
        %v1058 = vpop.permute.xlu0 %1057
        %1059 = vrot.lane.b32.xlu0 %v293, 24
        %v1060 = vpop.permute.xlu0 %1059
        %1061 = vrot.lane.b32.xlu0 %v295, 24
        %v1062 = vpop.permute.xlu0 %1061
        %1063 = vrot.lane.b32.xlu0 %v296, 24
        %v1064 = vpop.permute.xlu0 %1063
        %1065 = vrot.lane.b32.xlu0 %v298, 24
        %v1066 = vpop.permute.xlu0 %1065
        %1067 = vrot.lane.b32.xlu0 %v299, 24
        %v1068 = vpop.permute.xlu0 %1067
        %1069 = vrot.lane.b32.xlu0 %v301, 24
        %v1070 = vpop.permute.xlu0 %1069
        %1071 = vrot.lane.b32.xlu0 %v302, 24
        %v1072 = vpop.permute.xlu0 %1071
        %1073 = vrot.lane.b32.xlu0 %v304, 24
        %v1074 = vpop.permute.xlu0 %1073
        %1075 = vrot.lane.b32.xlu0 %v305, 24
        %v1076 = vpop.permute.xlu0 %1075
        %1077 = vrot.lane.b32.xlu0 %v307, 24
        %v1078 = vpop.permute.xlu0 %1077
        %1079 = vrot.lane.b32.xlu0 %v308, 24
        %v1080 = vpop.permute.xlu0 %1079
        %1081 = vrot.lane.b32.xlu0 %v310, 24
        %v1082 = vpop.permute.xlu0 %1081
        %1083 = vrot.lane.b32.xlu0 %v311, 24
        %v1084 = vpop.permute.xlu0 %1083
        %1085 = vrot.lane.b32.xlu0 %v313, 24
        %v1086 = vpop.permute.xlu0 %1085
        %1087 = vrot.lane.b32.xlu0 %v314, 24
        %v1088 = vpop.permute.xlu0 %1087
        %1089 = vrot.lane.b32.xlu0 %v316, 24
        %v1090 = vpop.permute.xlu0 %1089
        %1091 = vrot.lane.b32.xlu0 %v317, 24
        %v1092 = vpop.permute.xlu0 %1091
        %1093 = vrot.lane.b32.xlu0 %v319, 24
        %v1094 = vpop.permute.xlu0 %1093
        %1095 = vrot.lane.b32.xlu0 %v320, 24
        %v1096 = vpop.permute.xlu0 %1095
        %1097 = vrot.lane.b32.xlu0 %v322, 24
        %v1098 = vpop.permute.xlu0 %1097
        %1099 = vrot.lane.b32.xlu0 %v323, 24
        %v1100 = vpop.permute.xlu0 %1099
        %1101 = vrot.lane.b32.xlu0 %v325, 24
        %v1102 = vpop.permute.xlu0 %1101
        %1103 = vrot.lane.b32.xlu0 %v326, 24
        %v1104 = vpop.permute.xlu0 %1103
        %1105 = vrot.lane.b32.xlu0 %v328, 24
        %v1106 = vpop.permute.xlu0 %1105
        %1107 = vrot.lane.b32.xlu0 %v329, 24
        %v1108 = vpop.permute.xlu0 %1107
        %1109 = vrot.lane.b32.xlu0 %v331, 24
        %v1110 = vpop.permute.xlu0 %1109
        %1111 = vrot.lane.b32.xlu0 %v332, 24
        %v1112 = vpop.permute.xlu0 %1111
        %1113 = vrot.lane.b32.xlu0 %v334, 24
        %v1114 = vpop.permute.xlu0 %1113
        %1115 = vrot.lane.b32.xlu0 %v335, 24
        %v1116 = vpop.permute.xlu0 %1115
        %1149 = vrot.lane.b32.xlu0 %v398, 28
        %v1150 = vpop.permute.xlu0 %1149
        %1151 = vrot.lane.b32.xlu0 %v400, 28
        %v1152 = vpop.permute.xlu0 %1151
        %1153 = vrot.lane.b32.xlu0 %v403, 28
        %v1154 = vpop.permute.xlu0 %1153
        %1155 = vrot.lane.b32.xlu0 %v405, 28
        %v1156 = vpop.permute.xlu0 %1155
        %1157 = vrot.lane.b32.xlu0 %v408, 28
        %v1158 = vpop.permute.xlu0 %1157
        %1159 = vrot.lane.b32.xlu0 %v410, 28
        %v1160 = vpop.permute.xlu0 %1159
        %1161 = vrot.lane.b32.xlu0 %v413, 28
        %v1162 = vpop.permute.xlu0 %1161
        %1163 = vrot.lane.b32.xlu0 %v415, 28
        %v1164 = vpop.permute.xlu0 %1163
        %1165 = vrot.lane.b32.xlu0 %v418, 28
        %v1166 = vpop.permute.xlu0 %1165
        %1167 = vrot.lane.b32.xlu0 %v420, 28
        %v1168 = vpop.permute.xlu0 %1167
        %1169 = vrot.lane.b32.xlu0 %v423, 28
        %v1170 = vpop.permute.xlu0 %1169
        %1171 = vrot.lane.b32.xlu0 %v425, 28
        %v1172 = vpop.permute.xlu0 %1171
        %1173 = vrot.lane.b32.xlu0 %v428, 28
        %v1174 = vpop.permute.xlu0 %1173
        %1175 = vrot.lane.b32.xlu0 %v430, 28
        %v1176 = vpop.permute.xlu0 %1175
        %1177 = vrot.lane.b32.xlu0 %v433, 28
        %v1178 = vpop.permute.xlu0 %1177
        %1179 = vrot.lane.b32.xlu0 %v435, 28
        %v1180 = vpop.permute.xlu0 %1179
        %1181 = vrot.lane.b32.xlu0 %v438, 28
        %v1182 = vpop.permute.xlu0 %1181
        %1183 = vrot.lane.b32.xlu0 %v440, 28
        %v1184 = vpop.permute.xlu0 %1183
        %1185 = vrot.lane.b32.xlu0 %v443, 28
        %v1186 = vpop.permute.xlu0 %1185
        %1187 = vrot.lane.b32.xlu0 %v445, 28
        %v1188 = vpop.permute.xlu0 %1187
        %1189 = vrot.lane.b32.xlu0 %v448, 28
        %v1190 = vpop.permute.xlu0 %1189
        %1191 = vrot.lane.b32.xlu0 %v450, 28
        %v1192 = vpop.permute.xlu0 %1191
        %1193 = vrot.lane.b32.xlu0 %v453, 28
        %v1194 = vpop.permute.xlu0 %1193
        %1195 = vrot.lane.b32.xlu0 %v455, 28
        %v1196 = vpop.permute.xlu0 %1195
        %1197 = vrot.lane.b32.xlu0 %v458, 28
        %v1198 = vpop.permute.xlu0 %1197
        %1199 = vrot.lane.b32.xlu0 %v460, 28
        %v1200 = vpop.permute.xlu0 %1199
        %1201 = vrot.lane.b32.xlu0 %v463, 28
        %v1202 = vpop.permute.xlu0 %1201
        %1203 = vrot.lane.b32.xlu0 %v465, 28
        %v1204 = vpop.permute.xlu0 %1203
        %1205 = vrot.lane.b32.xlu0 %v552, 28
        %v1206 = vpop.permute.xlu0 %1205
        %1207 = vrot.lane.b32.xlu0 %v554, 28
        %v1208 = vpop.permute.xlu0 %1207
        %1209 = vrot.lane.b32.xlu0 %v565, 28
        %v1210 = vpop.permute.xlu0 %1209
        %1211 = vrot.lane.b32.xlu0 %v567, 28
        %v1212 = vpop.permute.xlu0 %1211
        %1245 = vrot.lane.b32.xlu0 %v479, 32
        %v1246 = vpop.permute.xlu0 %1245
        %1247 = vrot.lane.b32.xlu0 %v481, 32
        %v1248 = vpop.permute.xlu0 %1247
        %1249 = vrot.lane.b32.xlu0 %v484, 32
        %v1250 = vpop.permute.xlu0 %1249
        %1251 = vrot.lane.b32.xlu0 %v486, 32
        %v1252 = vpop.permute.xlu0 %1251
        %1253 = vrot.lane.b32.xlu0 %v489, 32
        %v1254 = vpop.permute.xlu0 %1253
        %1255 = vrot.lane.b32.xlu0 %v491, 32
        %v1256 = vpop.permute.xlu0 %1255
        %1257 = vrot.lane.b32.xlu0 %v494, 32
        %v1258 = vpop.permute.xlu0 %1257
        %1259 = vrot.lane.b32.xlu0 %v496, 32
        %v1260 = vpop.permute.xlu0 %1259
        %1261 = vrot.lane.b32.xlu0 %v499, 32
        %v1262 = vpop.permute.xlu0 %1261
        %1263 = vrot.lane.b32.xlu0 %v501, 32
        %v1264 = vpop.permute.xlu0 %1263
        %1265 = vrot.lane.b32.xlu0 %v504, 32
        %v1266 = vpop.permute.xlu0 %1265
        %1267 = vrot.lane.b32.xlu0 %v506, 32
        %v1268 = vpop.permute.xlu0 %1267
        %1269 = vrot.lane.b32.xlu0 %v509, 32
        %v1270 = vpop.permute.xlu0 %1269
        %1271 = vrot.lane.b32.xlu0 %v511, 32
        %v1272 = vpop.permute.xlu0 %1271
        %1273 = vrot.lane.b32.xlu0 %v514, 32
        %v1274 = vpop.permute.xlu0 %1273
        %1275 = vrot.lane.b32.xlu0 %v516, 32
        %v1276 = vpop.permute.xlu0 %1275
        %1277 = vrot.lane.b32.xlu0 %v519, 32
        %v1278 = vpop.permute.xlu0 %1277
        %1279 = vrot.lane.b32.xlu0 %v521, 32
        %v1280 = vpop.permute.xlu0 %1279
        %1281 = vrot.lane.b32.xlu0 %v524, 32
        %v1282 = vpop.permute.xlu0 %1281
        %1283 = vrot.lane.b32.xlu0 %v526, 32
        %v1284 = vpop.permute.xlu0 %1283
        %1285 = vrot.lane.b32.xlu0 %v529, 32
        %v1286 = vpop.permute.xlu0 %1285
        %1287 = vrot.lane.b32.xlu0 %v531, 32
        %v1288 = vpop.permute.xlu0 %1287
        %1289 = vrot.lane.b32.xlu0 %v534, 32
        %v1290 = vpop.permute.xlu0 %1289
        %1291 = vrot.lane.b32.xlu0 %v536, 32
        %v1292 = vpop.permute.xlu0 %1291
        %1293 = vrot.lane.b32.xlu0 %v539, 32
        %v1294 = vpop.permute.xlu0 %1293
        %1295 = vrot.lane.b32.xlu0 %v541, 32
        %v1296 = vpop.permute.xlu0 %1295
        %1297 = vrot.lane.b32.xlu0 %v544, 32
        %v1298 = vpop.permute.xlu0 %1297
        %1299 = vrot.lane.b32.xlu0 %v546, 32
        %v1300 = vpop.permute.xlu0 %1299
        %1301 = vrot.lane.b32.xlu0 %v557, 32
        %v1302 = vpop.permute.xlu0 %1301
        %1303 = vrot.lane.b32.xlu0 %v559, 32
        %v1304 = vpop.permute.xlu0 %1303
        %1305 = vrot.lane.b32.xlu0 %v570, 32
        %v1306 = vpop.permute.xlu0 %1305
        %1307 = vrot.lane.b32.xlu0 %v572, 32
        %v1308 = vpop.permute.xlu0 %1307
        %vm1341 = vcmask 31744
        %v1342 = vsel %vm1341, %v283, %v574
        %v1343 = vsel %vm1341, %v284, %v576
        %v1344 = vsel %vm1341, %v286, %v578
        %v1345 = vsel %vm1341, %v287, %v580
        %v1346 = vsel %vm1341, %v289, %v582
        %v1347 = vsel %vm1341, %v290, %v584
        %v1348 = vsel %vm1341, %v292, %v586
        %v1349 = vsel %vm1341, %v293, %v588
        %v1350 = vsel %vm1341, %v295, %v590
        %v1351 = vsel %vm1341, %v296, %v592
        %v1352 = vsel %vm1341, %v298, %v594
        %v1353 = vsel %vm1341, %v299, %v596
        %v1354 = vsel %vm1341, %v301, %v598
        %v1355 = vsel %vm1341, %v302, %v600
        %v1356 = vsel %vm1341, %v304, %v602
        %v1357 = vsel %vm1341, %v305, %v604
        %v1358 = vsel %vm1341, %v307, %v606
        %v1359 = vsel %vm1341, %v308, %v608
        %v1360 = vsel %vm1341, %v310, %v610
        %v1361 = vsel %vm1341, %v311, %v612
        %v1362 = vsel %vm1341, %v313, %v614
        %v1363 = vsel %vm1341, %v314, %v616
        %v1364 = vsel %vm1341, %v316, %v618
        %v1365 = vsel %vm1341, %v317, %v620
        %v1366 = vsel %vm1341, %v319, %v622
        %v1367 = vsel %vm1341, %v320, %v624
        %v1368 = vsel %vm1341, %v322, %v626
        %v1369 = vsel %vm1341, %v323, %v628
        %v1370 = vsel %vm1341, %v325, %v630
        %v1371 = vsel %vm1341, %v326, %v632
        %v1372 = vsel %vm1341, %v328, %v634
        %v1373 = vsel %vm1341, %v329, %v636
        %vm1374 = vcmask 64512
        %v1375 = vsel %vm1374, %v1342, %v670
        %v1376 = vsel %vm1374, %v1343, %v672
        %v1377 = vsel %vm1374, %v1344, %v674
        %v1378 = vsel %vm1374, %v1345, %v676
        %v1379 = vsel %vm1374, %v1346, %v678
        %v1380 = vsel %vm1374, %v1347, %v680
        %v1381 = vsel %vm1374, %v1348, %v682
        %v1382 = vsel %vm1374, %v1349, %v684
        %v1383 = vsel %vm1374, %v1350, %v686
        %v1384 = vsel %vm1374, %v1351, %v688
        %v1385 = vsel %vm1374, %v1352, %v690
        %v1386 = vsel %vm1374, %v1353, %v692
        %v1387 = vsel %vm1374, %v1354, %v694
        %v1388 = vsel %vm1374, %v1355, %v696
        %v1389 = vsel %vm1374, %v1356, %v698
        %v1390 = vsel %vm1374, %v1357, %v700
        %v1391 = vsel %vm1374, %v1358, %v702
        %v1392 = vsel %vm1374, %v1359, %v704
        %v1393 = vsel %vm1374, %v1360, %v706
        %v1394 = vsel %vm1374, %v1361, %v708
        %v1395 = vsel %vm1374, %v1362, %v710
        %v1396 = vsel %vm1374, %v1363, %v712
        %v1397 = vsel %vm1374, %v1364, %v714
        %v1398 = vsel %vm1374, %v1365, %v716
        %v1399 = vsel %vm1374, %v1366, %v718
        %v1400 = vsel %vm1374, %v1367, %v720
        %v1401 = vsel %vm1374, %v1368, %v722
        %v1402 = vsel %vm1374, %v1369, %v724
        %v1403 = vsel %vm1374, %v1370, %v726
        %v1404 = vsel %vm1374, %v1371, %v728
        %v1405 = vsel %vm1374, %v1372, %v730
        %v1406 = vsel %vm1374, %v1373, %v732
        %vm1407 = vcmask 97280
        %v1408 = vsel %vm1407, %v1375, %v766
        %v1409 = vsel %vm1407, %v1376, %v768
        %v1410 = vsel %vm1407, %v1377, %v770
        %v1411 = vsel %vm1407, %v1378, %v772
        %v1412 = vsel %vm1407, %v1379, %v774
        %v1413 = vsel %vm1407, %v1380, %v776
        %v1414 = vsel %vm1407, %v1381, %v778
        %v1415 = vsel %vm1407, %v1382, %v780
        %v1416 = vsel %vm1407, %v1383, %v782
        %v1417 = vsel %vm1407, %v1384, %v784
        %v1418 = vsel %vm1407, %v1385, %v786
        %v1419 = vsel %vm1407, %v1386, %v788
        %v1420 = vsel %vm1407, %v1387, %v790
        %v1421 = vsel %vm1407, %v1388, %v792
        %v1422 = vsel %vm1407, %v1389, %v794
        %v1423 = vsel %vm1407, %v1390, %v796
        %v1424 = vsel %vm1407, %v1391, %v798
        %v1425 = vsel %vm1407, %v1392, %v800
        %v1426 = vsel %vm1407, %v1393, %v802
        %v1427 = vsel %vm1407, %v1394, %v804
        %v1428 = vsel %vm1407, %v1395, %v806
        %v1429 = vsel %vm1407, %v1396, %v808
        %v1430 = vsel %vm1407, %v1397, %v810
        %v1431 = vsel %vm1407, %v1398, %v812
        %v1432 = vsel %vm1407, %v1399, %v814
        %v1433 = vsel %vm1407, %v1400, %v816
        %v1434 = vsel %vm1407, %v1401, %v818
        %v1435 = vsel %vm1407, %v1402, %v820
        %v1436 = vsel %vm1407, %v1403, %v822
        %v1437 = vsel %vm1407, %v1404, %v824
        %v1438 = vsel %vm1407, %v1405, %v826
        %v1439 = vsel %vm1407, %v1406, %v828
        %vm1440 = vcmask 130048
        %v1441 = vsel %vm1440, %v1408, %v862
        %v1442 = vsel %vm1440, %v1409, %v864
        %v1443 = vsel %vm1440, %v1410, %v866
        %v1444 = vsel %vm1440, %v1411, %v868
        %v1445 = vsel %vm1440, %v1412, %v870
        %v1446 = vsel %vm1440, %v1413, %v872
        %v1447 = vsel %vm1440, %v1414, %v874
        %v1448 = vsel %vm1440, %v1415, %v876
        %v1449 = vsel %vm1440, %v1416, %v878
        %v1450 = vsel %vm1440, %v1417, %v880
        %v1451 = vsel %vm1440, %v1418, %v882
        %v1452 = vsel %vm1440, %v1419, %v884
        %v1453 = vsel %vm1440, %v1420, %v886
        %v1454 = vsel %vm1440, %v1421, %v888
        %v1455 = vsel %vm1440, %v1422, %v890
        %v1456 = vsel %vm1440, %v1423, %v892
        %v1457 = vsel %vm1440, %v1424, %v894
        %v1458 = vsel %vm1440, %v1425, %v896
        %v1459 = vsel %vm1440, %v1426, %v898
        %v1460 = vsel %vm1440, %v1427, %v900
        %v1461 = vsel %vm1440, %v1428, %v902
        %v1462 = vsel %vm1440, %v1429, %v904
        %v1463 = vsel %vm1440, %v1430, %v906
        %v1464 = vsel %vm1440, %v1431, %v908
        %v1465 = vsel %vm1440, %v1432, %v910
        %v1466 = vsel %vm1440, %v1433, %v912
        %v1467 = vsel %vm1440, %v1434, %v914
        %v1468 = vsel %vm1440, %v1435, %v916
        %v1469 = vsel %vm1440, %v1436, %v918
        %v1470 = vsel %vm1440, %v1437, %v920
        %v1471 = vsel %vm1440, %v1438, %v922
        %v1472 = vsel %vm1440, %v1439, %v924
        %vm1473 = vcmask 162816
        %v1474 = vsel %vm1473, %v1441, %v958
        %v1475 = vsel %vm1473, %v1442, %v960
        %v1476 = vsel %vm1473, %v1443, %v962
        %v1477 = vsel %vm1473, %v1444, %v964
        %v1478 = vsel %vm1473, %v1445, %v966
        %v1479 = vsel %vm1473, %v1446, %v968
        %v1480 = vsel %vm1473, %v1447, %v970
        %v1481 = vsel %vm1473, %v1448, %v972
        %v1482 = vsel %vm1473, %v1449, %v974
        %v1483 = vsel %vm1473, %v1450, %v976
        %v1484 = vsel %vm1473, %v1451, %v978
        %v1485 = vsel %vm1473, %v1452, %v980
        %v1486 = vsel %vm1473, %v1453, %v982
        %v1487 = vsel %vm1473, %v1454, %v984
        %v1488 = vsel %vm1473, %v1455, %v986
        %v1489 = vsel %vm1473, %v1456, %v988
        %v1490 = vsel %vm1473, %v1457, %v990
        %v1491 = vsel %vm1473, %v1458, %v992
        %v1492 = vsel %vm1473, %v1459, %v994
        %v1493 = vsel %vm1473, %v1460, %v996
        %v1494 = vsel %vm1473, %v1461, %v998
        %v1495 = vsel %vm1473, %v1462, %v1000
        %v1496 = vsel %vm1473, %v1463, %v1002
        %v1497 = vsel %vm1473, %v1464, %v1004
        %v1498 = vsel %vm1473, %v1465, %v1006
        %v1499 = vsel %vm1473, %v1466, %v1008
        %v1500 = vsel %vm1473, %v1467, %v1010
        %v1501 = vsel %vm1473, %v1468, %v1012
        %v1502 = vsel %vm1473, %v1469, %v1014
        %v1503 = vsel %vm1473, %v1470, %v1016
        %v1504 = vsel %vm1473, %v1471, %v1018
        %v1505 = vsel %vm1473, %v1472, %v1020
        %vm1506 = vcmask 195584
        %v1507 = vsel %vm1506, %v1474, %v1054
        %v1508 = vsel %vm1506, %v1475, %v1056
        %v1509 = vsel %vm1506, %v1476, %v1058
        %v1510 = vsel %vm1506, %v1477, %v1060
        %v1511 = vsel %vm1506, %v1478, %v1062
        %v1512 = vsel %vm1506, %v1479, %v1064
        %v1513 = vsel %vm1506, %v1480, %v1066
        %v1514 = vsel %vm1506, %v1481, %v1068
        %v1515 = vsel %vm1506, %v1482, %v1070
        %v1516 = vsel %vm1506, %v1483, %v1072
        %v1517 = vsel %vm1506, %v1484, %v1074
        %v1518 = vsel %vm1506, %v1485, %v1076
        %v1519 = vsel %vm1506, %v1486, %v1078
        %v1520 = vsel %vm1506, %v1487, %v1080
        %v1521 = vsel %vm1506, %v1488, %v1082
        %v1522 = vsel %vm1506, %v1489, %v1084
        %v1523 = vsel %vm1506, %v1490, %v1086
        %v1524 = vsel %vm1506, %v1491, %v1088
        %v1525 = vsel %vm1506, %v1492, %v1090
        %v1526 = vsel %vm1506, %v1493, %v1092
        %v1527 = vsel %vm1506, %v1494, %v1094
        %v1528 = vsel %vm1506, %v1495, %v1096
        %v1529 = vsel %vm1506, %v1496, %v1098
        %v1530 = vsel %vm1506, %v1497, %v1100
        %v1531 = vsel %vm1506, %v1498, %v1102
        %v1532 = vsel %vm1506, %v1499, %v1104
        %v1533 = vsel %vm1506, %v1500, %v1106
        %v1534 = vsel %vm1506, %v1501, %v1108
        %v1535 = vsel %vm1506, %v1502, %v1110
        %v1536 = vsel %vm1506, %v1503, %v1112
        %v1537 = vsel %vm1506, %v1504, %v1114
        %v1538 = vsel %vm1506, %v1505, %v1116
        %vm1539 = vcmask 228352
        %v1540 = vsel %vm1539, %v1507, %v1150
        %v1541 = vsel %vm1539, %v1508, %v1152
        %v1542 = vsel %vm1539, %v1509, %v1154
        %v1543 = vsel %vm1539, %v1510, %v1156
        %v1544 = vsel %vm1539, %v1511, %v1158
        %v1545 = vsel %vm1539, %v1512, %v1160
        %v1546 = vsel %vm1539, %v1513, %v1162
        %v1547 = vsel %vm1539, %v1514, %v1164
        %v1548 = vsel %vm1539, %v1515, %v1166
        %v1549 = vsel %vm1539, %v1516, %v1168
        %v1550 = vsel %vm1539, %v1517, %v1170
        %v1551 = vsel %vm1539, %v1518, %v1172
        %v1552 = vsel %vm1539, %v1519, %v1174
        %v1553 = vsel %vm1539, %v1520, %v1176
        %v1554 = vsel %vm1539, %v1521, %v1178
        %v1555 = vsel %vm1539, %v1522, %v1180
        %v1556 = vsel %vm1539, %v1523, %v1182
        %v1557 = vsel %vm1539, %v1524, %v1184
        %v1558 = vsel %vm1539, %v1525, %v1186
        %v1559 = vsel %vm1539, %v1526, %v1188
        %v1560 = vsel %vm1539, %v1527, %v1190
        %v1561 = vsel %vm1539, %v1528, %v1192
        %v1562 = vsel %vm1539, %v1529, %v1194
        %v1563 = vsel %vm1539, %v1530, %v1196
        %v1564 = vsel %vm1539, %v1531, %v1198
        %v1565 = vsel %vm1539, %v1532, %v1200
        %v1566 = vsel %vm1539, %v1533, %v1202
        %v1567 = vsel %vm1539, %v1534, %v1204
        %v1568 = vsel %vm1539, %v1535, %v1206
        %v1569 = vsel %vm1539, %v1536, %v1208
        %v1570 = vsel %vm1539, %v1537, %v1210
        %v1571 = vsel %vm1539, %v1538, %v1212
        %vm1572 = vcmask 261120
        %v1573 = vsel %vm1572, %v1540, %v1246
        %v1574 = vsel %vm1572, %v1541, %v1248
        %v1575 = vsel %vm1572, %v1542, %v1250
        %v1576 = vsel %vm1572, %v1543, %v1252
        %v1577 = vsel %vm1572, %v1544, %v1254
        %v1578 = vsel %vm1572, %v1545, %v1256
        %v1579 = vsel %vm1572, %v1546, %v1258
        %v1580 = vsel %vm1572, %v1547, %v1260
        %v1581 = vsel %vm1572, %v1548, %v1262
        %v1582 = vsel %vm1572, %v1549, %v1264
        %v1583 = vsel %vm1572, %v1550, %v1266
        %v1584 = vsel %vm1572, %v1551, %v1268
        %v1585 = vsel %vm1572, %v1552, %v1270
        %v1586 = vsel %vm1572, %v1553, %v1272
        %v1587 = vsel %vm1572, %v1554, %v1274
        %v1588 = vsel %vm1572, %v1555, %v1276
        %v1589 = vsel %vm1572, %v1556, %v1278
        %v1590 = vsel %vm1572, %v1557, %v1280
        %v1591 = vsel %vm1572, %v1558, %v1282
        %v1592 = vsel %vm1572, %v1559, %v1284
        %v1593 = vsel %vm1572, %v1560, %v1286
        %v1594 = vsel %vm1572, %v1561, %v1288
        %v1595 = vsel %vm1572, %v1562, %v1290
        %v1596 = vsel %vm1572, %v1563, %v1292
        %v1597 = vsel %vm1572, %v1564, %v1294
        %v1598 = vsel %vm1572, %v1565, %v1296
        %v1599 = vsel %vm1572, %v1566, %v1298
        %v1600 = vsel %vm1572, %v1567, %v1300
        %v1601 = vsel %vm1572, %v1568, %v1302
        %v1602 = vsel %vm1572, %v1569, %v1304
        %v1603 = vsel %vm1572, %v1570, %v1306
        %v1604 = vsel %vm1572, %v1571, %v1308
        %v1605 = vld [vmem:[%s2] sm:$0xff]
        %v1606 = vld [vmem:[%s2 + $0x8] sm:$0xff]
        %v1607 = vld [vmem:[%s2 + $0x10] sm:$0xff]
        %v1608 = vld [vmem:[%s2 + $0x18] sm:$0xff]
        %v1609 = vld [vmem:[%s2 + $0x20] sm:$0xf]
        %v1610 = vld [vmem:[%s3] sm:$0x1]
        %v1612 = vlaneseq
        %v1613 = vshrl.u32 %v1612, 7
        %v1614 = vsub.s32 0, %v1613
        %v1615 = vrot.slane %v1610, %v1614
        %vm1617 = vcmask 293888
        %v1619 = vsel %vm1617, %v1573, 0
        %v1622 = vsel %vm1617, %v1574, 0
        %v1625 = vsel %vm1617, %v1575, 0
        %v1628 = vsel %vm1617, %v1576, 0
        %v1631 = vsel %vm1617, %v1577, 0
        %v1634 = vsel %vm1617, %v1578, 0
        %v1637 = vsel %vm1617, %v1579, 0
        %v1640 = vsel %vm1617, %v1580, 0
        %v1643 = vsel %vm1617, %v1581, 0
        %v1646 = vsel %vm1617, %v1582, 0
        %v1649 = vsel %vm1617, %v1583, 0
        %v1652 = vsel %vm1617, %v1584, 0
        %v1655 = vsel %vm1617, %v1585, 0
        %v1658 = vsel %vm1617, %v1586, 0
        %v1661 = vsel %vm1617, %v1587, 0
        %v1664 = vsel %vm1617, %v1588, 0
        %v1667 = vsel %vm1617, %v1589, 0
        %v1670 = vsel %vm1617, %v1590, 0
        %v1673 = vsel %vm1617, %v1591, 0
        %v1676 = vsel %vm1617, %v1592, 0
        %v1679 = vsel %vm1617, %v1593, 0
        %v1682 = vsel %vm1617, %v1594, 0
        %v1685 = vsel %vm1617, %v1595, 0
        %v1688 = vsel %vm1617, %v1596, 0
        %v1691 = vsel %vm1617, %v1597, 0
        %v1694 = vsel %vm1617, %v1598, 0
        %v1697 = vsel %vm1617, %v1599, 0
        %v1700 = vsel %vm1617, %v1600, 0
        %v1703 = vsel %vm1617, %v1601, 0
        %v1706 = vsel %vm1617, %v1602, 0
        %v1709 = vsel %vm1617, %v1603, 0
        %v1712 = vsel %vm1617, %v1604, 0
        %vm1714 = vcmask 1043456
        %v1716 = vsel %vm1714, %v1609, 0
        %1718 = vmatprep.subr.mxu0 0.0
        %1719 = vmatpush1.msra.mxu0 %v1605
        %1720 = vmatprep.subr.mxu0 0.0
        %1721 = vmatpush1.msra.mxu0 %v1606
        %1722 = vmatprep.subr.mxu0 0.0
        %1723 = vmatpush1.msra.mxu0 %v1607
        %1724 = vmatprep.subr.mxu0 0.0
        %1725 = vmatpush1.msra.mxu0 %v1608
        %1726 = vmatprep.subr.mxu0 0.0
        %1727 = vmatpush1.msra.mxu0 %v1716
        %1728 = vmatprep.subr.mxu0 0.0
        %1729 = vmatpush1.msra.mxu0 0.0
        %1730 = vmatprep.subr.mxu0 0.0
        %1731 = vmatpush1.msra.mxu0 0.0
        %1732 = vmatprep.subr.mxu0 0.0
        %1733 = vmatpush1.msra.mxu0 0.0
        %1734 = vmatprep.subr.mxu0 0.0
        %1735 = vmatpush1.msra.mxu0 0.0
        %1736 = vmatprep.subr.mxu0 0.0
        %1737 = vmatpush1.msra.mxu0 0.0
        %1738 = vmatprep.subr.mxu0 0.0
        %1739 = vmatpush1.msra.mxu0 0.0
        %1740 = vmatprep.subr.mxu0 0.0
        %1741 = vmatpush1.msra.mxu0 0.0
        %1742 = vmatprep.subr.mxu0 0.0
        %1743 = vmatpush1.msra.mxu0 0.0
        %1744 = vmatprep.subr.mxu0 0.0
        %1745 = vmatpush1.msra.mxu0 0.0
        %1746 = vmatprep.subr.mxu0 0.0
        %1747 = vmatpush1.msra.mxu0 0.0
        %1748 = vmatprep.subr.mxu0 0.0
        %1749 = vmatpush1.msra.mxu0 0.0
        %1750 = vmatprep.subr.mxu0 0.0
        %1751 = vmatpush1.msra.mxu0 0.0
        %1752 = vmatprep.subr.mxu0 0.0
        %1753 = vmatpush1.msra.mxu0 0.0
        %1754 = vmatprep.subr.mxu0 0.0
        %1755 = vmatpush1.msra.mxu0 0.0
        %1756 = vmatprep.subr.mxu0 0.0
        %1757 = vmatpush1.msra.mxu0 0.0
        %1758 = vmatprep.subr.mxu0 0.0
        %1759 = vmatpush1.msra.mxu0 0.0
        %1760 = vmatprep.subr.mxu0 0.0
        %1761 = vmatpush1.msra.mxu0 0.0
        %1762 = vmatprep.subr.mxu0 0.0
        %1763 = vmatpush1.msra.mxu0 0.0
        %1764 = vmatprep.subr.mxu0 0.0
        %1765 = vmatpush1.msra.mxu0 0.0
        %1766 = vmatprep.subr.mxu0 0.0
        %1767 = vmatpush1.msra.mxu0 0.0
        %1768 = vmatprep.subr.mxu0 0.0
        %1769 = vmatpush1.msra.mxu0 0.0
        %1770 = vmatprep.subr.mxu0 0.0
        %1771 = vmatpush1.msra.mxu0 0.0
        %1772 = vmatprep.subr.mxu0 0.0
        %1773 = vmatpush1.msra.mxu0 0.0
        %1774 = vmatprep.subr.mxu0 0.0
        %1775 = vmatpush1.msra.mxu0 0.0
        %1776 = vmatprep.subr.mxu0 0.0
        %1777 = vmatpush1.msra.mxu0 0.0
        %1778 = vmatprep.subr.mxu0 0.0
        %1779 = vmatpush1.msra.mxu0 0.0
        %1780 = vmatprep.subr.mxu0 0.0
        %1781 = vmatpush1.msra.mxu0 0.0
        %1782 = vmatprep.mubr.f32.mxu0 0.0
        %1783 = vmatmul.mubr.f32.gmra.mrb[0].mxu0 %v1619
        %v1784 = vpop.f32.mrb[0].mxu0
        %v1785 = vadd.f32 %v1615, %v1784
        %v1786 = vpop.f32.mrb[0].mxu0
        %1787 = vmatprep.mubr.f32.mxu0 0.0
        %1788 = vmatmul.mubr.f32.gmra.mrb[0].mxu0 %v1622
        %v1789 = vpop.f32.mrb[0].mxu0
        %v1790 = vadd.f32 %v1615, %v1789
        %v1791 = vpop.f32.mrb[0].mxu0
        %1792 = vmatprep.mubr.f32.mxu0 0.0
        %1793 = vmatmul.mubr.f32.gmra.mrb[0].mxu0 %v1625
        %v1794 = vpop.f32.mrb[0].mxu0
        %v1795 = vadd.f32 %v1615, %v1794
        %v1796 = vpop.f32.mrb[0].mxu0
        %1797 = vmatprep.mubr.f32.mxu0 0.0
        %1798 = vmatmul.mubr.f32.gmra.mrb[0].mxu0 %v1628
        %v1799 = vpop.f32.mrb[0].mxu0
        %v1800 = vadd.f32 %v1615, %v1799
        %v1801 = vpop.f32.mrb[0].mxu0
        %1802 = vmatprep.mubr.f32.mxu0 0.0
        %1803 = vmatmul.mubr.f32.gmra.mrb[0].mxu0 %v1631
        %v1804 = vpop.f32.mrb[0].mxu0
        %v1805 = vadd.f32 %v1615, %v1804
        %v1806 = vpop.f32.mrb[0].mxu0
        %1807 = vmatprep.mubr.f32.mxu0 0.0
        %1808 = vmatmul.mubr.f32.gmra.mrb[0].mxu0 %v1634
        %v1809 = vpop.f32.mrb[0].mxu0
        %v1810 = vadd.f32 %v1615, %v1809
        %v1811 = vpop.f32.mrb[0].mxu0
        %1812 = vmatprep.mubr.f32.mxu0 0.0
        %1813 = vmatmul.mubr.f32.gmra.mrb[0].mxu0 %v1637
        %v1814 = vpop.f32.mrb[0].mxu0
        %v1815 = vadd.f32 %v1615, %v1814
        %v1816 = vpop.f32.mrb[0].mxu0
        %1817 = vmatprep.mubr.f32.mxu0 0.0
        %1818 = vmatmul.mubr.f32.gmra.mrb[0].mxu0 %v1640
        %v1819 = vpop.f32.mrb[0].mxu0
        %v1820 = vadd.f32 %v1615, %v1819
        %v1821 = vpop.f32.mrb[0].mxu0
        %1822 = vmatprep.mubr.f32.mxu0 0.0
        %1823 = vmatmul.mubr.f32.gmra.mrb[0].mxu0 %v1643
        %v1824 = vpop.f32.mrb[0].mxu0
        %v1825 = vadd.f32 %v1615, %v1824
        %v1826 = vpop.f32.mrb[0].mxu0
        %1827 = vmatprep.mubr.f32.mxu0 0.0
        %1828 = vmatmul.mubr.f32.gmra.mrb[0].mxu0 %v1646
        %v1829 = vpop.f32.mrb[0].mxu0
        %v1830 = vadd.f32 %v1615, %v1829
        %v1831 = vpop.f32.mrb[0].mxu0
        %1832 = vmatprep.mubr.f32.mxu0 0.0
        %1833 = vmatmul.mubr.f32.gmra.mrb[0].mxu0 %v1649
        %v1834 = vpop.f32.mrb[0].mxu0
        %v1835 = vadd.f32 %v1615, %v1834
        %v1836 = vpop.f32.mrb[0].mxu0
        %1837 = vmatprep.mubr.f32.mxu0 0.0
        %1838 = vmatmul.mubr.f32.gmra.mrb[0].mxu0 %v1652
        %v1839 = vpop.f32.mrb[0].mxu0
        %v1840 = vadd.f32 %v1615, %v1839
        %v1841 = vpop.f32.mrb[0].mxu0
        %1842 = vmatprep.mubr.f32.mxu0 0.0
        %1843 = vmatmul.mubr.f32.gmra.mrb[0].mxu0 %v1655
        %v1844 = vpop.f32.mrb[0].mxu0
        %v1845 = vadd.f32 %v1615, %v1844
        %v1846 = vpop.f32.mrb[0].mxu0
        %1847 = vmatprep.mubr.f32.mxu0 0.0
        %1848 = vmatmul.mubr.f32.gmra.mrb[0].mxu0 %v1658
        %v1849 = vpop.f32.mrb[0].mxu0
        %v1850 = vadd.f32 %v1615, %v1849
        %v1851 = vpop.f32.mrb[0].mxu0
        %1852 = vmatprep.mubr.f32.mxu0 0.0
        %1853 = vmatmul.mubr.f32.gmra.mrb[0].mxu0 %v1661
        %v1854 = vpop.f32.mrb[0].mxu0
        %v1855 = vadd.f32 %v1615, %v1854
        %v1856 = vpop.f32.mrb[0].mxu0
        %1857 = vmatprep.mubr.f32.mxu0 0.0
        %1858 = vmatmul.mubr.f32.gmra.mrb[0].mxu0 %v1664
        %v1859 = vpop.f32.mrb[0].mxu0
        %v1860 = vadd.f32 %v1615, %v1859
        %v1861 = vpop.f32.mrb[0].mxu0
        %1862 = vmatprep.mubr.f32.mxu0 0.0
        %1863 = vmatmul.mubr.f32.gmra.mrb[0].mxu0 %v1667
        %v1864 = vpop.f32.mrb[0].mxu0
        %v1865 = vadd.f32 %v1615, %v1864
        %v1866 = vpop.f32.mrb[0].mxu0
        %1867 = vmatprep.mubr.f32.mxu0 0.0
        %1868 = vmatmul.mubr.f32.gmra.mrb[0].mxu0 %v1670
        %v1869 = vpop.f32.mrb[0].mxu0
        %v1870 = vadd.f32 %v1615, %v1869
        %v1871 = vpop.f32.mrb[0].mxu0
        %1872 = vmatprep.mubr.f32.mxu0 0.0
        %1873 = vmatmul.mubr.f32.gmra.mrb[0].mxu0 %v1673
        %v1874 = vpop.f32.mrb[0].mxu0
        %v1875 = vadd.f32 %v1615, %v1874
        %v1876 = vpop.f32.mrb[0].mxu0
        %1877 = vmatprep.mubr.f32.mxu0 0.0
        %1878 = vmatmul.mubr.f32.gmra.mrb[0].mxu0 %v1676
        %v1879 = vpop.f32.mrb[0].mxu0
        %v1880 = vadd.f32 %v1615, %v1879
        %v1881 = vpop.f32.mrb[0].mxu0
        %1882 = vmatprep.mubr.f32.mxu0 0.0
        %1883 = vmatmul.mubr.f32.gmra.mrb[0].mxu0 %v1679
        %v1884 = vpop.f32.mrb[0].mxu0
        %v1885 = vadd.f32 %v1615, %v1884
        %v1886 = vpop.f32.mrb[0].mxu0
        %1887 = vmatprep.mubr.f32.mxu0 0.0
        %1888 = vmatmul.mubr.f32.gmra.mrb[0].mxu0 %v1682
        %v1889 = vpop.f32.mrb[0].mxu0
        %v1890 = vadd.f32 %v1615, %v1889
        %v1891 = vpop.f32.mrb[0].mxu0
        %1892 = vmatprep.mubr.f32.mxu0 0.0
        %1893 = vmatmul.mubr.f32.gmra.mrb[0].mxu0 %v1685
        %v1894 = vpop.f32.mrb[0].mxu0
        %v1895 = vadd.f32 %v1615, %v1894
        %v1896 = vpop.f32.mrb[0].mxu0
        %1897 = vmatprep.mubr.f32.mxu0 0.0
        %1898 = vmatmul.mubr.f32.gmra.mrb[0].mxu0 %v1688
        %v1899 = vpop.f32.mrb[0].mxu0
        %v1900 = vadd.f32 %v1615, %v1899
        %v1901 = vpop.f32.mrb[0].mxu0
        %1902 = vmatprep.mubr.f32.mxu0 0.0
        %1903 = vmatmul.mubr.f32.gmra.mrb[0].mxu0 %v1691
        %v1904 = vpop.f32.mrb[0].mxu0
        %v1905 = vadd.f32 %v1615, %v1904
        %v1906 = vpop.f32.mrb[0].mxu0
        %1907 = vmatprep.mubr.f32.mxu0 0.0
        %1908 = vmatmul.mubr.f32.gmra.mrb[0].mxu0 %v1694
        %v1909 = vpop.f32.mrb[0].mxu0
        %v1910 = vadd.f32 %v1615, %v1909
        %v1911 = vpop.f32.mrb[0].mxu0
        %1912 = vmatprep.mubr.f32.mxu0 0.0
        %1913 = vmatmul.mubr.f32.gmra.mrb[0].mxu0 %v1697
        %v1914 = vpop.f32.mrb[0].mxu0
        %v1915 = vadd.f32 %v1615, %v1914
        %v1916 = vpop.f32.mrb[0].mxu0
        %1917 = vmatprep.mubr.f32.mxu0 0.0
        %1918 = vmatmul.mubr.f32.gmra.mrb[0].mxu0 %v1700
        %v1919 = vpop.f32.mrb[0].mxu0
        %v1920 = vadd.f32 %v1615, %v1919
        %v1921 = vpop.f32.mrb[0].mxu0
        %1922 = vmatprep.mubr.f32.mxu0 0.0
        %1923 = vmatmul.mubr.f32.gmra.mrb[0].mxu0 %v1703
        %v1924 = vpop.f32.mrb[0].mxu0
        %v1925 = vadd.f32 %v1615, %v1924
        %v1926 = vpop.f32.mrb[0].mxu0
        %1927 = vmatprep.mubr.f32.mxu0 0.0
        %1928 = vmatmul.mubr.f32.gmra.mrb[0].mxu0 %v1706
        %v1929 = vpop.f32.mrb[0].mxu0
        %v1930 = vadd.f32 %v1615, %v1929
        %v1931 = vpop.f32.mrb[0].mxu0
        %1932 = vmatprep.mubr.f32.mxu0 0.0
        %1933 = vmatmul.mubr.f32.gmra.mrb[0].mxu0 %v1709
        %v1934 = vpop.f32.mrb[0].mxu0
        %v1935 = vadd.f32 %v1615, %v1934
        %v1936 = vpop.f32.mrb[0].mxu0
        %1937 = vmatprep.mubr.f32.mxu0 0.0
        %1938 = vmatmul.mubr.f32.gmra.mrb[0].mxu0 %v1712
        %v1939 = vpop.f32.mrb[0].mxu0
        %v1940 = vadd.f32 %v1615, %v1939
        %v1941 = vpop.f32.mrb[0].mxu0
        %1942 = vdwg.mxu0
        %v1943 = vmax.f32 %v1785, 0.0
        %v1944 = vmax.f32 %v1790, 0.0
        %v1945 = vmax.f32 %v1795, 0.0
        %v1946 = vmax.f32 %v1800, 0.0
        %v1947 = vmax.f32 %v1805, 0.0
        %v1948 = vmax.f32 %v1810, 0.0
        %v1949 = vmax.f32 %v1815, 0.0
        %v1950 = vmax.f32 %v1820, 0.0
        %v1951 = vmax.f32 %v1825, 0.0
        %v1952 = vmax.f32 %v1830, 0.0
        %v1953 = vmax.f32 %v1835, 0.0
        %v1954 = vmax.f32 %v1840, 0.0
        %v1955 = vmax.f32 %v1845, 0.0
        %v1956 = vmax.f32 %v1850, 0.0
        %v1957 = vmax.f32 %v1855, 0.0
        %v1958 = vmax.f32 %v1860, 0.0
        %v1959 = vmax.f32 %v1865, 0.0
        %v1960 = vmax.f32 %v1870, 0.0
        %v1961 = vmax.f32 %v1875, 0.0
        %v1962 = vmax.f32 %v1880, 0.0
        %v1963 = vmax.f32 %v1885, 0.0
        %v1964 = vmax.f32 %v1890, 0.0
        %v1965 = vmax.f32 %v1895, 0.0
        %v1966 = vmax.f32 %v1900, 0.0
        %v1967 = vmax.f32 %v1905, 0.0
        %v1968 = vmax.f32 %v1910, 0.0
        %v1969 = vmax.f32 %v1915, 0.0
        %v1970 = vmax.f32 %v1920, 0.0
        %v1971 = vmax.f32 %v1925, 0.0
        %v1972 = vmax.f32 %v1930, 0.0
        %v1973 = vmax.f32 %v1935, 0.0
        %v1974 = vmax.f32 %v1940, 0.0
        %1975 = vxpose.xlu0.b32.start [1/16] %v1943, 128
        %1976 = vxpose.xlu0.b32.cont [2/16] %v1944, 128
        %1977 = vxpose.xlu0.b32.cont [3/16] %v1945, 128
        %1978 = vxpose.xlu0.b32.cont [4/16] %v1946, 128
        %1979 = vxpose.xlu0.b32.cont [5/16] %v1947, 128
        %1980 = vxpose.xlu0.b32.cont [6/16] %v1948, 128
        %1981 = vxpose.xlu0.b32.cont [7/16] %v1949, 128
        %1982 = vxpose.xlu0.b32.cont [8/16] %v1950, 128
        %1983 = vxpose.xlu0.b32.cont [9/16] %v1951, 128
        %1984 = vxpose.xlu0.b32.cont [10/16] %v1952, 128
        %1985 = vxpose.xlu0.b32.cont [11/16] %v1953, 128
        %1986 = vxpose.xlu0.b32.cont [12/16] %v1954, 128
        %1987 = vxpose.xlu0.b32.cont [13/16] %v1955, 128
        %1988 = vxpose.xlu0.b32.cont [14/16] %v1956, 128
        %1989 = vxpose.xlu0.b32.cont [15/16] %v1957, 128
        %1990 = vxpose.xlu0.b32.end [16/16] %v1958, 128
        %v1991 = vpop.trf.xlu0
        %v1992 = vpop.trf.xlu0
        %v1993 = vpop.trf.xlu0
        %v1994 = vpop.trf.xlu0
        %v1995 = vpop.trf.xlu0
        %v1996 = vpop.trf.xlu0
        %v1997 = vpop.trf.xlu0
        %v1998 = vpop.trf.xlu0
        %v1999 = vpop.trf.xlu0
        %v2000 = vpop.trf.xlu0
        %v2001 = vpop.trf.xlu0
        %v2002 = vpop.trf.xlu0
        %v2003 = vpop.trf.xlu0
        %v2004 = vpop.trf.xlu0
        %v2005 = vpop.trf.xlu0
        %v2006 = vpop.trf.xlu0
        %2007 = vxpose.xlu0.b32.start [1/16] %v1959, 128
        %2008 = vxpose.xlu0.b32.cont [2/16] %v1960, 128
        %2009 = vxpose.xlu0.b32.cont [3/16] %v1961, 128
        %2010 = vxpose.xlu0.b32.cont [4/16] %v1962, 128
        %2011 = vxpose.xlu0.b32.cont [5/16] %v1963, 128
        %2012 = vxpose.xlu0.b32.cont [6/16] %v1964, 128
        %2013 = vxpose.xlu0.b32.cont [7/16] %v1965, 128
        %2014 = vxpose.xlu0.b32.cont [8/16] %v1966, 128
        %2015 = vxpose.xlu0.b32.cont [9/16] %v1967, 128
        %2016 = vxpose.xlu0.b32.cont [10/16] %v1968, 128
        %2017 = vxpose.xlu0.b32.cont [11/16] %v1969, 128
        %2018 = vxpose.xlu0.b32.cont [12/16] %v1970, 128
        %2019 = vxpose.xlu0.b32.cont [13/16] %v1971, 128
        %2020 = vxpose.xlu0.b32.cont [14/16] %v1972, 128
        %2021 = vxpose.xlu0.b32.cont [15/16] %v1973, 128
        %2022 = vxpose.xlu0.b32.end [16/16] %v1974, 128
        %v2023 = vpop.trf.xlu0
        %v2024 = vpop.trf.xlu0
        %v2025 = vpop.trf.xlu0
        %v2026 = vpop.trf.xlu0
        %v2027 = vpop.trf.xlu0
        %v2028 = vpop.trf.xlu0
        %v2029 = vpop.trf.xlu0
        %v2030 = vpop.trf.xlu0
        %v2031 = vpop.trf.xlu0
        %v2032 = vpop.trf.xlu0
        %v2033 = vpop.trf.xlu0
        %v2034 = vpop.trf.xlu0
        %v2035 = vpop.trf.xlu0
        %v2036 = vpop.trf.xlu0
        %v2037 = vpop.trf.xlu0
        %v2038 = vpop.trf.xlu0
        %2039 = vst [vmem:[%s255] sm:$0xff] %v1991
        %2040 = vst [vmem:[%s255 + $0x8] sm:$0xff] %v2023
        %s2041 = sand.u32 %s142, 1
        %s2042 = scalar_lea.sflag [#allocation3], %s2041
        %s2043 = sand.u32 %s142, 1
        %s2044 = smul.addr %s2043, 16
        %s2045 = scalar_lea.vmem [#allocation2], %s2044
        // Predicated region
        $region37: #{tpu_custom_call.1} parent=35 // pred_check
          %p2046 = pneg %p152
        $region38: #{tpu_custom_call.1} parent=35 // pred_check_branch
          %2048 = sbr.rel (%p2046) target = $region40
        $region39: #{tpu_custom_call.1} parent=35 // pred_region
          %s2049 = smul.u32 2, %s23
          %s2051 = ssub.s32 256, 256
          %2052 = vsyncadd %s2042, %s2051
          %s2053 = smul.addr %s22, 2
          %s2054 = sadd.s32 %s2049, %s2053
          %s2055 = smul.addr %s2054, 128
          %s2056 = scalar_lea.hbm %s4, %s2055
          %s2058 = sshll.u32 %s2045, 4
          %s2059 = int_to_ptr.vmem [resolvable:$true] %s2058
          %2061 = dma.vmem_to_hbm [thread:$0]  %s2059, 256, %s2056, %s2042
        $region40: #{tpu_custom_call.1} parent=35 // pred_fallthru
          _
      $region36: #{tpu_custom_call.1} parent=5 // pred_fallthru
        _
      %p2062 = scmp.le.s32.totalorder 2, %s13
      // Predicated region
      $region41: #{tpu_custom_call.1} parent=5 // pred_check
        %p2063 = pneg %p2062
      $region42: #{tpu_custom_call.1} parent=5 // pred_check_branch
        %2065 = sbr.rel (%p2063) target = $region44
      $region43: #{tpu_custom_call.1} parent=5 // pred_region
        %s2066 = ssub.s32 %s13, 2
        // Predicated region
        $region45: #{tpu_custom_call.1} parent=43 // pred_check
          %p2067 = pneg %p158
        $region46: #{tpu_custom_call.1} parent=43 // pred_check_branch
          %2069 = sbr.rel (%p2067) target = $region48
        $region47: #{tpu_custom_call.1} parent=43 // pred_region
          %s2070 = sand.u32 %s143, 1
          %s2071 = scalar_lea.sflag [#allocation3], %s2070
          %s2072 = sand.u32 %s143, 1
          %s2073 = smul.addr %s2072, 16
          %s2074 = scalar_lea.vmem [#allocation2], %s2073
          %2075 = dma.done %s2071, 256
        $region48: #{tpu_custom_call.1} parent=43 // pred_fallthru
          _
      $region44: #{tpu_custom_call.1} parent=5 // pred_fallthru
        _
    $region6: #{tpu_custom_call.1} parent=1 // loop_footer
      %s17 = sadd.s32 1, %s13
    $region7: #{tpu_custom_call.1} parent=1 // loop_footer_branch
      %12 = sbr.rel target = $region3
    $region8: #{tpu_custom_call.1} parent=1 // loop_exit
      _
    %2076 = vsyncpa [#allocation3], 1
    %s2077 = scalar_lea.sflag [#allocation3], 1
    %2078 = vsyncpa %s2077, 1

</llo_original>
